<compile_context>
chip_gen: v6e
topology: v6e:2x2x1
jax: 0.10.0
libtpu: 0.0.40
codegen_flags: <defaults>
</compile_context>

<pallas_src>
import jax
import jax.numpy as jnp
from jax.experimental import pallas as pl
from jax.experimental.pallas import tpu as pltpu

BN_EPS = 1e-5


# -------------------------- hardware-aware limits ---------------------------

def _vmem_capacity_bytes():
    try:
        return int(pltpu.get_tpu_info().vmem_capacity_bytes)
    except Exception:
        return 64 * 1024 * 1024            # conservative (v7x) fallback

_VMEM_CAP = _vmem_capacity_bytes()


def _round128(c):
    return ((c + 127) // 128) * 128


def _plan_block_tiles(lh, cin_eff, cin_s, cmid_s, K, pad, hx, has_ds):
    """Pick the largest output-L tile that fits an explicit VMEM byte budget."""
    budget = int(_VMEM_CAP * 0.75)
    a, w = 2, 2                                             # bf16 activations / weights
    fixed = (2 * lh * cin_eff * a                           # x block (2 pipeline buffers)
             + (lh + 2 * hx) * cin_eff * a                  # halo-padded xp scratch
             + 2 * K * cin_s * cmid_s * w                   # w1 (2 buffers)
             + 2 * K * cmid_s * cmid_s * w                  # w2
             + (2 * cin_s * cmid_s * w if has_ds else 0)    # downsample w
             + 8 * cmid_s * 4)                              # shifts

    def tile_bytes(t):
        tm = t + 2 * pad
        return (2 * t * cmid_s * a            # output block (2 buffers)
                + tm * cmid_s * a             # mid scratch (bf16)
                + tm * cmid_s * 4             # conv1 f32 accumulator
                + t * cmid_s * 4              # conv2 f32 accumulator
                + 2 * tm * max(cin_s, cmid_s) * a)   # live operand slabs (slack)

    tile = None
    if lh <= 1024 and fixed + tile_bytes(lh) <= budget:
        tile = lh                                           # single tile
    if tile is None:
        t = (min(lh, 1024) // 8) * 8
        while t >= 8:
            if lh % t == 0 and fixed + tile_bytes(t) <= budget:
                tile = t
                break
            t -= 8
    if tile is None:
        for t in range(min(lh, 1024), 0, -1):
            if lh % t == 0 and fixed + tile_bytes(t) <= budget:
                tile = t
                break
    if tile is None:
        # TODO(synk): halo-tiled x (pl.ANY + manual DMA) + masked ragged tail
        # for sequences whose resident activation alone exceeds the budget.
        tile = lh

    total = fixed + tile_bytes(tile)
    vmem_limit = int(min(_VMEM_CAP * 0.9, max(total * 1.25, 32 << 20)))
    return tile, lh // tile, vmem_limit


# --------------------------- fused BasicBlock kernel -------------------------

def _make_block_kernel(K, stride, cin_s, cmid_s, pad, hx, tile, lh,
                       n_l_tiles, has_ds):
    """conv1+shift+ReLU -> VMEM mid -> conv2+shift (+downsample residual) +add+ReLU.

    For stride==2 the input ref is the polyphase view (N, lh, 2*cin_s) with
    channels packed [even | odd]; every tap is then a dense slice (no strided
    ref reads).  Boundary zeros come from the halo rows of the xp scratch.
    """
    cin_eff = cin_s * (2 if stride == 2 else 1)
    tm = tile + 2 * pad                     # mid rows computed per tile (conv2 halo)

    def body(x_ref, w1_ref, s1_ref, w2_ref, s2_ref, *rest):
        if has_ds:
            wd_ref, sd_ref, o_ref, xp_ref, mid_ref = rest
        else:
            o_ref, xp_ref, mid_ref = rest

        def fill_xp():
            # zero halos + copy this batch's activation (VMEM-only traffic).
            zeros = jnp.zeros((hx, cin_eff), jnp.bfloat16)
            xp_ref[0:hx, :] = zeros
            xp_ref[hx + lh:hx + lh + hx, :] = zeros
            xp_ref[hx:hx + lh, :] = x_ref[0]

        if n_l_tiles == 1:
            t0 = 0                          # fully static indexing
            fill_xp()
        else:
            j = pl.program_id(1)
            t0 = j * tile
            pl.when(j == 0)(fill_xp)

        # ---- conv1 (+ folded BN shift + ReLU) over the tile plus conv2 halo ----
        acc1 = jnp.zeros((tm, cmid_s), jnp.float32)
        for k in range(K):                  # static unroll, K in {1, 3, ...}
            if stride == 1:
                rs, c0 = hx + k - 2 * pad, 0
            else:                           # polyphase: parity picks channel slab
                rs = hx - pad + ((k - pad) >> 1)
                c0 = ((k - pad) & 1) * cin_s
            # NOTE: +/-1 row offsets are sublane-misaligned loads; accepted.
            # TODO(synk): synthesize the shifts with pltpu.roll (XLU) instead.
            xk = xp_ref[pl.ds(t0 + rs, tm), c0:c0 + cin_s]
            acc1 = acc1 + jnp.dot(xk, w1_ref[k], preferred_element_type=jnp.float32)
        mid = jnp.maximum(acc1 + s1_ref[...], 0.0)
        # Rows outside [0, lh) are conv2's zero padding, not conv1(padded x).
        g = t0 - pad + jax.lax.broadcasted_iota(jnp.int32, (tm, 1), 0)
        mid = jnp.where((g >= 0) & (g < lh), mid, 0.0)
        mid_ref[...] = mid.astype(jnp.bfloat16)

        # ---- residual path (identity or fused 1x1 downsample conv) ----
        xr = xp_ref[pl.ds(t0 + hx, tile), 0:cin_s]   # stride-2: even phase slab
        if has_ds:
            res = jnp.dot(xr, wd_ref[0],
                          preferred_element_type=jnp.float32) + sd_ref[...]
        else:
            res = xr.astype(jnp.float32)

        # ---- conv2 (+ folded BN shift) + residual add + ReLU ----
        acc2 = jnp.zeros((tile, cmid_s), jnp.float32)
        for k in range(K):
            acc2 = acc2 + jnp.dot(mid_ref[k:k + tile, :], w2_ref[k],
                                  preferred_element_type=jnp.float32)
        y = jnp.maximum(acc2 + s2_ref[...] + res, 0.0)
        o_ref[0] = y.astype(o_ref.dtype)

    return body


def basic_block_forward(x, p, kernel_size):
    """x: (N, L, cin_s) bf16 channels-last (cin_s = stored, 128-padded channels)."""
    N, L, cin_s = x.shape
    K = kernel_size
    pad = (K - 1) // 2
    stride = p["stride"]
    cmid_s = p["conv1_w"].shape[-1]
    has_ds = p["downsample"] is not None

    if stride == 2:
        if L % 2:                           # rare odd-L case: one zero row
            x = jnp.pad(x, ((0, 0), (0, 1), (0, 0)))
            L += 1
        lh = L // 2
        cin_eff = 2 * cin_s
        xin = x.reshape(N, lh, cin_eff)     # free polyphase view: [even | odd]
    else:
        lh, cin_eff, xin = L, cin_s, x

    hx = ((2 * pad + 7) // 8) * 8           # sublane-aligned halo depth
    tile, n_l_tiles, vmem_limit = _plan_block_tiles(
        lh, cin_eff, cin_s, cmid_s, K, pad, hx, has_ds)

    # TODO(synk): pipeline_mode=pl.Buffered(1) on the resident x / weight specs
    # would halve their footprint; omitted for lowering robustness.
    in_specs = [
        pl.BlockSpec((1, lh, cin_eff), lambda n, j: (n, 0, 0)),      # x / batch
        pl.BlockSpec((K, cin_s, cmid_s), lambda n, j: (0, 0, 0)),    # w1 resident
        pl.BlockSpec((1, cmid_s), lambda n, j: (0, 0)),              # shift1
        pl.BlockSpec((K, cmid_s, cmid_s), lambda n, j: (0, 0, 0)),   # w2 resident
        pl.BlockSpec((1, cmid_s), lambda n, j: (0, 0)),              # shift2
    ]
    args = [xin, p["conv1_w"], p["conv1_shift"], p["conv2_w"], p["conv2_shift"]]
    if has_ds:
        in_specs += [pl.BlockSpec((1, cin_s, cmid_s), lambda n, j: (0, 0, 0)),
                     pl.BlockSpec((1, cmid_s), lambda n, j: (0, 0))]
        args += [p["downsample"]["w"], p["downsample"]["shift"]]

    flops = 2 * N * lh * (K * cin_s + K * cmid_s + (cin_s if has_ds else 0)) * cmid_s
    w_bytes = sum(int(a.size) * a.dtype.itemsize for a in args[1:])
    bytes_accessed = int(xin.size) * 2 + w_bytes + N * lh * cmid_s * 2

    kernel = _make_block_kernel(K, stride, cin_s, cmid_s, pad, hx, tile, lh,
                                n_l_tiles, has_ds)
    return pl.pallas_call(
        kernel,
        out_shape=jax.ShapeDtypeStruct((N, lh, cmid_s), jnp.bfloat16),
        grid=(N, n_l_tiles),
        in_specs=in_specs,
        out_specs=pl.BlockSpec((1, tile, cmid_s), lambda n, j: (n, j, 0)),
        scratch_shapes=[pltpu.VMEM((lh + 2 * hx, cin_eff), jnp.bfloat16),
                        pltpu.VMEM((tile + 2 * pad, cmid_s), jnp.bfloat16)],
        compiler_params=pltpu.CompilerParams(
            dimension_semantics=("parallel", "arbitrary"),
            vmem_limit_bytes=vmem_limit),
        cost_estimate=pl.CostEstimate(flops=int(flops), transcendentals=0,
                                      bytes_accessed=int(bytes_accessed)),
    )(*args)


# ------------------------------- stem conv ----------------------------------

def stem_conv(x_ncl, w, b, pad, cout_s):
    """nn.Conv1d(input_channels, 64, K, stride=1, padding=(K-1)//2) as plain XLA.

    Cin is tiny (typically 1): in Pallas this activation would be lane-sparse
    (a few useful values per vreg), so this negligible-FLOP conv stays in XLA
    and directly emits the channels-last, 128-padded bf16 activation.
    """
    N, cin, L = x_ncl.shape
    cout, _, K = w.shape
    xl = jnp.transpose(x_ncl, (0, 2, 1)).astype(jnp.float32)   # (N, L, Cin)
    xp = jnp.pad(xl, ((0, 0), (pad, pad), (0, 0)))
    wk = jnp.transpose(w, (2, 1, 0))                            # (K, Cin, Cout)
    acc = jnp.zeros((N, L, cout), jnp.float32) + b[None, None, :]
    for k in range(K):
        acc = acc + jnp.einsum("nlc,cd->nld", xp[:, k:k + L, :], wk[k])
    acc = jnp.pad(acc, ((0, 0), (0, 0), (0, cout_s - cout)))    # lane-pad to 128
    return acc.astype(jnp.bfloat16)


# ---------------------------- parameter packing ------------------------------

def _kaiming(key, shape):
    # kaiming_normal_ on Conv1d weight (Cout, Cin, K): std = sqrt(2 / (Cin*K))
    fan_in = shape[1] * shape[2]
    return jax.random.normal(key, shape, jnp.float32) * jnp.sqrt(2.0 / fan_in)


def _bn_fold(planes):
    # eval-mode BatchNorm1d at init: gamma=1, beta=0, mean=0, var=1
    scale = jnp.full((planes,), 1.0 / (1.0 + BN_EPS) ** 0.5, jnp.float32)
    shift = jnp.zeros((planes,), jnp.float32)
    return scale, shift


def _pack_weight(w, scale, cin_store, cout_store):
    """PyTorch Conv1d weight (Cout, Cin, K) -> (K, cin_store, cout_store) bf16,
    BN scale folded in f32, single bf16 cast, zero-padded channels."""
    cout, cin, k = w.shape
    wk = jnp.transpose(w, (2, 1, 0))                       # (K, Cin, Cout)
    if scale is not None:
        wk = wk * scale.reshape(1, 1, cout)
    wp = jnp.zeros((k, cin_store, cout_store), jnp.float32)
    wp = wp.at[:, :cin, :cout].set(wk)
    return wp.astype(jnp.bfloat16)


def _pack_shift(shift, cout_store):
    sp = jnp.zeros((1, cout_store), jnp.float32)
    return sp.at[0, :shift.shape[0]].set(shift.astype(jnp.float32))


def init_basic_block(key, inplanes, planes, stride, kernel_size):
    k1, k2, k3 = jax.random.split(key, 3)
    cin_s, cmid_s = _round128(inplanes), _round128(planes)
    bn1_s, bn1_b = _bn_fold(planes)
    bn2_s, bn2_b = _bn_fold(planes)
    p = {
        "stride": stride,
        "channels": planes,
        "conv1_w": _pack_weight(_kaiming(k1, (planes, inplanes, kernel_size)),
                                bn1_s, cin_s, cmid_s),
        "conv1_shift": _pack_shift(bn1_b, cmid_s),
        "conv2_w": _pack_weight(_kaiming(k2, (planes, planes, kernel_size)),
                                bn2_s, cmid_s, cmid_s),
        "conv2_shift": _pack_shift(bn2_b, cmid_s),
        "downsample": None,
    }
    if stride != 1 or inplanes != planes:
        # per reference: downsample = nn.Conv1d(inplanes, planes, 1, stride)
        # (bias=True, no BatchNorm)
        p["downsample"] = {
            "w": _pack_weight(_kaiming(k3, (planes, inplanes, 1)),
                              None, cin_s, cmid_s),
            "shift": _pack_shift(jnp.zeros((planes,), jnp.float32), cmid_s),
        }
    return p


def init_resnet1d(key, layers, kernel_size=3, input_channels=1, first_channels=64):
    n_blocks = sum(layers)
    keys = jax.random.split(key, 1 + n_blocks)
    params = {
        "conv1_w": _kaiming(keys[0], (64, input_channels, kernel_size)),
        "conv1_b": jnp.zeros((64,), jnp.float32),
        "blocks": [],
    }
    inplanes = first_channels
    channels = first_channels
    kidx = 1
    for li, nblocks in enumerate(layers):
        if li == 0:
            planes, group_stride = 64, 1
        else:
            channels *= 2
            planes, group_stride = channels, 2
        for b in range(nblocks):
            s = group_stride if b == 0 else 1
            params["blocks"].append(
                init_basic_block(keys[kidx], inplanes, planes, s, kernel_size))
            inplanes = planes
            kidx += 1
    return params


# -------------------------------- forward ------------------------------------

def resnet1d_forward(x, params, kernel_size=3, return_multiple_outputs=False):
    pad = (kernel_size - 1) // 2
    # Reference forward() applies only self.conv1 (bn1 / relu are built but unused).
    h = stem_conv(x, params["conv1_w"], params["conv1_b"], pad, _round128(64))
    outputs, chans = [], []
    for blk in params["blocks"]:
        h = basic_block_forward(h, blk, kernel_size)
        outputs.append(h)
        chans.append(blk["channels"])
    # TODO(synk): for tiny production shapes, fuse the whole block stack into a
    # single pallas_call with resident weights to remove per-block launches.

    def to_ncl(a, c):      # strip channel padding, back to PyTorch NCL, f32
        return jnp.transpose(a[..., :c], (0, 2, 1)).astype(jnp.float32)

    if return_multiple_outputs:
        return [to_ncl(o, c) for o, c in zip(outputs, chans)]
    return to_ncl(outputs[-1], chans[-1])


# --------------------------------- driver ------------------------------------

if __name__ == "__main__":
    key = jax.random.PRNGKey(0)
    pkey, xkey = jax.random.split(key)

    kernel_size = 3
    params = init_resnet1d(pkey, layers=[1, 1], kernel_size=kernel_size,
                           input_channels=1, first_channels=64)

    # PyTorch NCL input: (batch=2, channels=1, length=16)
    x = jax.random.normal(xkey, (2, 1, 16), dtype=jnp.float32)

    fwd = jax.jit(lambda inp: resnet1d_forward(inp, params, kernel_size=kernel_size))
    out = jax.block_until_ready(fwd(x))

    # conv1 -> (2,64,16); block0 (stride1) -> (2,64,16); block1 (stride2) -> (2,128,8)
    assert out.shape == (2, 128, 8), out.shape
    assert bool(jnp.all(jnp.isfinite(out)))
    print("KERNEL_OK")
</pallas_src>

<mosaic_0001>
module attributes {stable_mosaic.version = 11 : i64} {
  func.func @body(%arg0: i32, %arg1: i32, %arg2: memref<1x16x128xbf16, #tpu.memory_space<vmem>>, %arg3: memref<3x128x128xbf16, #tpu.memory_space<vmem>>, %arg4: memref<1x128xf32, #tpu.memory_space<vmem>>, %arg5: memref<3x128x128xbf16, #tpu.memory_space<vmem>>, %arg6: memref<1x128xf32, #tpu.memory_space<vmem>>, %arg7: memref<1x16x128xbf16, #tpu.memory_space<vmem>>, %arg8: memref<32x128xbf16, #tpu.memory_space<vmem>>, %arg9: memref<18x128xbf16, #tpu.memory_space<vmem>>) attributes {dimension_semantics = [#tpu.dimension_semantics<parallel>, #tpu.dimension_semantics<arbitrary>], iteration_bounds = array<i64: 2, 1>, scalar_prefetch = 0 : i64, scratch_operands = 2 : i64, tpu.core_type = #tpu.core_type<tc>, window_params = [{transform_indices = @transform_0, window_bounds = array<i64: 1, 16, 128>}, {pipeline_mode = #tpu.pipeline_mode<synchronous>, transform_indices = @transform_1, window_bounds = array<i64: 3, 128, 128>}, {pipeline_mode = #tpu.pipeline_mode<synchronous>, transform_indices = @transform_2, window_bounds = array<i64: 1, 128>}, {pipeline_mode = #tpu.pipeline_mode<synchronous>, transform_indices = @transform_3, window_bounds = array<i64: 3, 128, 128>}, {pipeline_mode = #tpu.pipeline_mode<synchronous>, transform_indices = @transform_4, window_bounds = array<i64: 1, 128>}, {transform_indices = @transform_5, window_bounds = array<i64: 1, 16, 128>}]} {
    %cst = arith.constant 0.000000e+00 : bf16
    %0 = vector.broadcast %cst : bf16 to vector<8x128xbf16>
    %c0 = arith.constant 0 : index
    %c0_0 = arith.constant 0 : index
    %1 = vector.load %arg8[%c0, %c0_0] : memref<32x128xbf16, #tpu.memory_space<vmem>>, vector<8x128xbf16>
    tpu.vector_store %arg8[%c0, %c0_0], %0 {strides = array<i32>} : memref<32x128xbf16, #tpu.memory_space<vmem>>, vector<8x128xbf16>,
    %c24 = arith.constant 24 : index
    %c0_1 = arith.constant 0 : index
    %2 = vector.load %arg8[%c24, %c0_1] : memref<32x128xbf16, #tpu.memory_space<vmem>>, vector<8x128xbf16>
    tpu.vector_store %arg8[%c24, %c0_1], %0 {strides = array<i32>} : memref<32x128xbf16, #tpu.memory_space<vmem>>, vector<8x128xbf16>,
    %c0_2 = arith.constant 0 : index
    %c0_3 = arith.constant 0 : index
    %c0_4 = arith.constant 0 : index
    %3 = vector.load %arg2[%c0_2, %c0_3, %c0_4] : memref<1x16x128xbf16, #tpu.memory_space<vmem>>, vector<1x16x128xbf16>
    %4 = vector.shape_cast %3 : vector<1x16x128xbf16> to vector<16x128xbf16>
    %c8 = arith.constant 8 : index
    %c0_5 = arith.constant 0 : index
    %5 = vector.load %arg8[%c8, %c0_5] : memref<32x128xbf16, #tpu.memory_space<vmem>>, vector<16x128xbf16>
    tpu.vector_store %arg8[%c8, %c0_5], %4 {strides = array<i32>} : memref<32x128xbf16, #tpu.memory_space<vmem>>, vector<16x128xbf16>,
    %cst_6 = arith.constant 0.000000e+00 : f32
    %6 = vector.broadcast %cst_6 : f32 to vector<18x128xf32>
    %c6 = arith.constant 6 : index
    %c0_7 = arith.constant 0 : index
    %7 = vector.load %arg8[%c6, %c0_7] : memref<32x128xbf16, #tpu.memory_space<vmem>>, vector<18x128xbf16>
    %c0_8 = arith.constant 0 : index
    %c0_9 = arith.constant 0 : index
    %c0_10 = arith.constant 0 : index
    %8 = vector.load %arg3[%c0_8, %c0_9, %c0_10] : memref<3x128x128xbf16, #tpu.memory_space<vmem>>, vector<1x128x128xbf16>
    %9 = vector.shape_cast %8 : vector<1x128x128xbf16> to vector<128x128xbf16>
    %cst_11 = arith.constant dense<0.000000e+00> : vector<18x128xf32>
    %10 = tpu.matmul %7, %9, %cst_11 {dimension_numbers = #tpu.dot_dimension_numbers<[1], [0], [0], [1], [0, 0, 1, 1], [], []>} : vector<18x128xbf16>, vector<128x128xbf16>, vector<18x128xf32> -> vector<18x128xf32>
    %11 = arith.addf %6, %10 : vector<18x128xf32>
    %c7 = arith.constant 7 : index
    %c0_12 = arith.constant 0 : index
    %12 = vector.load %arg8[%c7, %c0_12] : memref<32x128xbf16, #tpu.memory_space<vmem>>, vector<18x128xbf16>
    %c1 = arith.constant 1 : index
    %c0_13 = arith.constant 0 : index
    %c0_14 = arith.constant 0 : index
    %13 = vector.load %arg3[%c1, %c0_13, %c0_14] : memref<3x128x128xbf16, #tpu.memory_space<vmem>>, vector<1x128x128xbf16>
    %14 = vector.shape_cast %13 : vector<1x128x128xbf16> to vector<128x128xbf16>
    %cst_15 = arith.constant dense<0.000000e+00> : vector<18x128xf32>
    %15 = tpu.matmul %12, %14, %cst_15 {dimension_numbers = #tpu.dot_dimension_numbers<[1], [0], [0], [1], [0, 0, 1, 1], [], []>} : vector<18x128xbf16>, vector<128x128xbf16>, vector<18x128xf32> -> vector<18x128xf32>
    %16 = arith.addf %11, %15 : vector<18x128xf32>
    %c8_16 = arith.constant 8 : index
    %c0_17 = arith.constant 0 : index
    %17 = vector.load %arg8[%c8_16, %c0_17] : memref<32x128xbf16, #tpu.memory_space<vmem>>, vector<18x128xbf16>
    %c2 = arith.constant 2 : index
    %c0_18 = arith.constant 0 : index
    %c0_19 = arith.constant 0 : index
    %18 = vector.load %arg3[%c2, %c0_18, %c0_19] : memref<3x128x128xbf16, #tpu.memory_space<vmem>>, vector<1x128x128xbf16>
    %19 = vector.shape_cast %18 : vector<1x128x128xbf16> to vector<128x128xbf16>
    %cst_20 = arith.constant dense<0.000000e+00> : vector<18x128xf32>
    %20 = tpu.matmul %17, %19, %cst_20 {dimension_numbers = #tpu.dot_dimension_numbers<[1], [0], [0], [1], [0, 0, 1, 1], [], []>} : vector<18x128xbf16>, vector<128x128xbf16>, vector<18x128xf32> -> vector<18x128xf32>
    %21 = arith.addf %16, %20 : vector<18x128xf32>
    %c0_21 = arith.constant 0 : index
    %c0_22 = arith.constant 0 : index
    %22 = vector.load %arg4[%c0_21, %c0_22] : memref<1x128xf32, #tpu.memory_space<vmem>>, vector<1x128xf32>
    %23 = vector.broadcast %22 : vector<1x128xf32> to vector<18x128xf32>
    %24 = arith.addf %21, %23 : vector<18x128xf32>
    %cst_23 = arith.constant 0.000000e+00 : f32
    %25 = vector.broadcast %cst_23 : f32 to vector<18x128xf32>
    %26 = arith.maximumf %24, %25 : vector<18x128xf32>
    %27 = tpu.iota {dimensions = array<i32: 0>} : vector<18x1xi32>
    %c-1_i32 = arith.constant -1 : i32
    %28 = vector.broadcast %c-1_i32 : i32 to vector<18x1xi32>
    %29 = arith.addi %28, %27 : vector<18x1xi32>
    %c0_i32 = arith.constant 0 : i32
    %30 = vector.broadcast %c0_i32 : i32 to vector<18x1xi32>
    %31 = arith.cmpi sge, %29, %30 : vector<18x1xi32>
    %c16_i32 = arith.constant 16 : i32
    %32 = vector.broadcast %c16_i32 : i32 to vector<18x1xi32>
    %33 = arith.cmpi slt, %29, %32 : vector<18x1xi32>
    %34 = arith.andi %31, %33 : vector<18x1xi1>
    %cst_24 = arith.constant 0.000000e+00 : f32
    %35 = vector.shape_cast %34 : vector<18x1xi1> to vector<18x1xi1>
    %36 = vector.broadcast %35 : vector<18x1xi1> to vector<18x128xi1>
    %37 = vector.broadcast %cst_24 : f32 to vector<18x128xf32>
    %38 = arith.select %36, %26, %37 : vector<18x128xi1>, vector<18x128xf32>
    %39 = arith.truncf %38 : vector<18x128xf32> to vector<18x128xbf16>
    %c0_25 = arith.constant 0 : index
    %c0_26 = arith.constant 0 : index
    %40 = vector.load %arg9[%c0_25, %c0_26] : memref<18x128xbf16, #tpu.memory_space<vmem>>, vector<18x128xbf16>
    tpu.vector_store %arg9[%c0_25, %c0_26], %39 {strides = array<i32>} : memref<18x128xbf16, #tpu.memory_space<vmem>>, vector<18x128xbf16>,
    %c8_27 = arith.constant 8 : index
    %c0_28 = arith.constant 0 : index
    %41 = vector.load %arg8[%c8_27, %c0_28] : memref<32x128xbf16, #tpu.memory_space<vmem>>, vector<16x128xbf16>
    %42 = arith.extf %41 : vector<16x128xbf16> to vector<16x128xf32>
    %cst_29 = arith.constant 0.000000e+00 : f32
    %43 = vector.broadcast %cst_29 : f32 to vector<16x128xf32>
    %c0_30 = arith.constant 0 : index
    %c0_31 = arith.constant 0 : index
    %44 = vector.load %arg9[%c0_30, %c0_31] : memref<18x128xbf16, #tpu.memory_space<vmem>>, vector<16x128xbf16>
    %c0_32 = arith.constant 0 : index
    %c0_33 = arith.constant 0 : index
    %c0_34 = arith.constant 0 : index
    %45 = vector.load %arg5[%c0_32, %c0_33, %c0_34] : memref<3x128x128xbf16, #tpu.memory_space<vmem>>, vector<1x128x128xbf16>
    %46 = vector.shape_cast %45 : vector<1x128x128xbf16> to vector<128x128xbf16>
    %cst_35 = arith.constant dense<0.000000e+00> : vector<16x128xf32>
    %47 = tpu.matmul %44, %46, %cst_35 {dimension_numbers = #tpu.dot_dimension_numbers<[1], [0], [0], [1], [0, 0, 1, 1], [], []>} : vector<16x128xbf16>, vector<128x128xbf16>, vector<16x128xf32> -> vector<16x128xf32>
    %48 = arith.addf %43, %47 : vector<16x128xf32>
    %c1_36 = arith.constant 1 : index
    %c0_37 = arith.constant 0 : index
    %49 = vector.load %arg9[%c1_36, %c0_37] : memref<18x128xbf16, #tpu.memory_space<vmem>>, vector<16x128xbf16>
    %c1_38 = arith.constant 1 : index
    %c0_39 = arith.constant 0 : index
    %c0_40 = arith.constant 0 : index
    %50 = vector.load %arg5[%c1_38, %c0_39, %c0_40] : memref<3x128x128xbf16, #tpu.memory_space<vmem>>, vector<1x128x128xbf16>
    %51 = vector.shape_cast %50 : vector<1x128x128xbf16> to vector<128x128xbf16>
    %cst_41 = arith.constant dense<0.000000e+00> : vector<16x128xf32>
    %52 = tpu.matmul %49, %51, %cst_41 {dimension_numbers = #tpu.dot_dimension_numbers<[1], [0], [0], [1], [0, 0, 1, 1], [], []>} : vector<16x128xbf16>, vector<128x128xbf16>, vector<16x128xf32> -> vector<16x128xf32>
    %53 = arith.addf %48, %52 : vector<16x128xf32>
    %c2_42 = arith.constant 2 : index
    %c0_43 = arith.constant 0 : index
    %54 = vector.load %arg9[%c2_42, %c0_43] : memref<18x128xbf16, #tpu.memory_space<vmem>>, vector<16x128xbf16>
    %c2_44 = arith.constant 2 : index
    %c0_45 = arith.constant 0 : index
    %c0_46 = arith.constant 0 : index
    %55 = vector.load %arg5[%c2_44, %c0_45, %c0_46] : memref<3x128x128xbf16, #tpu.memory_space<vmem>>, vector<1x128x128xbf16>
    %56 = vector.shape_cast %55 : vector<1x128x128xbf16> to vector<128x128xbf16>
    %cst_47 = arith.constant dense<0.000000e+00> : vector<16x128xf32>
    %57 = tpu.matmul %54, %56, %cst_47 {dimension_numbers = #tpu.dot_dimension_numbers<[1], [0], [0], [1], [0, 0, 1, 1], [], []>} : vector<16x128xbf16>, vector<128x128xbf16>, vector<16x128xf32> -> vector<16x128xf32>
    %58 = arith.addf %53, %57 : vector<16x128xf32>
    %c0_48 = arith.constant 0 : index
    %c0_49 = arith.constant 0 : index
    %59 = vector.load %arg6[%c0_48, %c0_49] : memref<1x128xf32, #tpu.memory_space<vmem>>, vector<1x128xf32>
    %60 = vector.broadcast %59 : vector<1x128xf32> to vector<16x128xf32>
    %61 = arith.addf %58, %60 : vector<16x128xf32>
    %62 = arith.addf %61, %42 : vector<16x128xf32>
    %cst_50 = arith.constant 0.000000e+00 : f32
    %63 = vector.broadcast %cst_50 : f32 to vector<16x128xf32>
    %64 = arith.maximumf %62, %63 : vector<16x128xf32>
    %65 = arith.truncf %64 : vector<16x128xf32> to vector<16x128xbf16>
    %c0_51 = arith.constant 0 : index
    %c0_52 = arith.constant 0 : index
    %c0_53 = arith.constant 0 : index
    %66 = vector.load %arg7[%c0_51, %c0_52, %c0_53] : memref<1x16x128xbf16, #tpu.memory_space<vmem>>, vector<1x16x128xbf16>
    %67 = vector.shape_cast %66 : vector<1x16x128xbf16> to vector<16x128xbf16>
    %68 = vector.shape_cast %65 : vector<16x128xbf16> to vector<1x16x128xbf16>
    tpu.vector_store %arg7[%c0_51, %c0_52, %c0_53], %68 {strides = array<i32>} : memref<1x16x128xbf16, #tpu.memory_space<vmem>>, vector<1x16x128xbf16>,
    return
  }
  func.func @transform_0(%arg0: i32, %arg1: i32) -> (i32, i32, i32) {
    %c0_i32 = arith.constant 0 : i32
    %c0_i32_0 = arith.constant 0 : i32
    %c0_i32_1 = arith.constant 0 : i32
    return %arg0, %c0_i32, %c0_i32_0 : i32, i32, i32
  }
  func.func @transform_1(%arg0: i32, %arg1: i32) -> (i32, i32, i32) {
    %c0_i32 = arith.constant 0 : i32
    %c0_i32_0 = arith.constant 0 : i32
    %c0_i32_1 = arith.constant 0 : i32
    %c0_i32_2 = arith.constant 0 : i32
    return %c0_i32, %c0_i32_0, %c0_i32_1 : i32, i32, i32
  }
  func.func @transform_2(%arg0: i32, %arg1: i32) -> (i32, i32) {
    %c0_i32 = arith.constant 0 : i32
    %c0_i32_0 = arith.constant 0 : i32
    %c0_i32_1 = arith.constant 0 : i32
    return %c0_i32, %c0_i32_0 : i32, i32
  }
  func.func @transform_3(%arg0: i32, %arg1: i32) -> (i32, i32, i32) {
    %c0_i32 = arith.constant 0 : i32
    %c0_i32_0 = arith.constant 0 : i32
    %c0_i32_1 = arith.constant 0 : i32
    %c0_i32_2 = arith.constant 0 : i32
    return %c0_i32, %c0_i32_0, %c0_i32_1 : i32, i32, i32
  }
  func.func @transform_4(%arg0: i32, %arg1: i32) -> (i32, i32) {
    %c0_i32 = arith.constant 0 : i32
    %c0_i32_0 = arith.constant 0 : i32
    %c0_i32_1 = arith.constant 0 : i32
    return %c0_i32, %c0_i32_0 : i32, i32
  }
  func.func @transform_5(%arg0: i32, %arg1: i32) -> (i32, i32, i32) {
    %c0_i32 = arith.constant 0 : i32
    %c0_i32_0 = arith.constant 0 : i32
    return %arg0, %arg1, %c0_i32 : i32, i32, i32
  }
}

module attributes {stable_mosaic.version = 11 : i64} {
  func.func @body(%arg0: i32, %arg1: i32, %arg2: memref<1x8x256xbf16, #tpu.memory_space<vmem>>, %arg3: memref<3x128x128xbf16, #tpu.memory_space<vmem>>, %arg4: memref<1x128xf32, #tpu.memory_space<vmem>>, %arg5: memref<3x128x128xbf16, #tpu.memory_space<vmem>>, %arg6: memref<1x128xf32, #tpu.memory_space<vmem>>, %arg7: memref<1x128x128xbf16, #tpu.memory_space<vmem>>, %arg8: memref<1x128xf32, #tpu.memory_space<vmem>>, %arg9: memref<1x8x128xbf16, #tpu.memory_space<vmem>>, %arg10: memref<24x256xbf16, #tpu.memory_space<vmem>>, %arg11: memref<10x128xbf16, #tpu.memory_space<vmem>>) attributes {dimension_semantics = [#tpu.dimension_semantics<parallel>, #tpu.dimension_semantics<arbitrary>], iteration_bounds = array<i64: 2, 1>, scalar_prefetch = 0 : i64, scratch_operands = 2 : i64, tpu.core_type = #tpu.core_type<tc>, window_params = [{transform_indices = @transform_0, window_bounds = array<i64: 1, 8, 256>}, {pipeline_mode = #tpu.pipeline_mode<synchronous>, transform_indices = @transform_1, window_bounds = array<i64: 3, 128, 128>}, {pipeline_mode = #tpu.pipeline_mode<synchronous>, transform_indices = @transform_2, window_bounds = array<i64: 1, 128>}, {pipeline_mode = #tpu.pipeline_mode<synchronous>, transform_indices = @transform_3, window_bounds = array<i64: 3, 128, 128>}, {pipeline_mode = #tpu.pipeline_mode<synchronous>, transform_indices = @transform_4, window_bounds = array<i64: 1, 128>}, {pipeline_mode = #tpu.pipeline_mode<synchronous>, transform_indices = @transform_5, window_bounds = array<i64: 1, 128, 128>}, {pipeline_mode = #tpu.pipeline_mode<synchronous>, transform_indices = @transform_6, window_bounds = array<i64: 1, 128>}, {transform_indices = @transform_7, window_bounds = array<i64: 1, 8, 128>}]} {
    %cst = arith.constant 0.000000e+00 : bf16
    %0 = vector.broadcast %cst : bf16 to vector<8x256xbf16>
    %c0 = arith.constant 0 : index
    %c0_0 = arith.constant 0 : index
    %1 = vector.load %arg10[%c0, %c0_0] : memref<24x256xbf16, #tpu.memory_space<vmem>>, vector<8x256xbf16>
    tpu.vector_store %arg10[%c0, %c0_0], %0 {strides = array<i32>} : memref<24x256xbf16, #tpu.memory_space<vmem>>, vector<8x256xbf16>,
    %c16 = arith.constant 16 : index
    %c0_1 = arith.constant 0 : index
    %2 = vector.load %arg10[%c16, %c0_1] : memref<24x256xbf16, #tpu.memory_space<vmem>>, vector<8x256xbf16>
    tpu.vector_store %arg10[%c16, %c0_1], %0 {strides = array<i32>} : memref<24x256xbf16, #tpu.memory_space<vmem>>, vector<8x256xbf16>,
    %c0_2 = arith.constant 0 : index
    %c0_3 = arith.constant 0 : index
    %c0_4 = arith.constant 0 : index
    %3 = vector.load %arg2[%c0_2, %c0_3, %c0_4] : memref<1x8x256xbf16, #tpu.memory_space<vmem>>, vector<1x8x256xbf16>
    %4 = vector.shape_cast %3 : vector<1x8x256xbf16> to vector<8x256xbf16>
    %c8 = arith.constant 8 : index
    %c0_5 = arith.constant 0 : index
    %5 = vector.load %arg10[%c8, %c0_5] : memref<24x256xbf16, #tpu.memory_space<vmem>>, vector<8x256xbf16>
    tpu.vector_store %arg10[%c8, %c0_5], %4 {strides = array<i32>} : memref<24x256xbf16, #tpu.memory_space<vmem>>, vector<8x256xbf16>,
    %cst_6 = arith.constant 0.000000e+00 : f32
    %6 = vector.broadcast %cst_6 : f32 to vector<10x128xf32>
    %c6 = arith.constant 6 : index
    %c128 = arith.constant 128 : index
    %7 = vector.load %arg10[%c6, %c128] : memref<24x256xbf16, #tpu.memory_space<vmem>>, vector<10x128xbf16>
    %c0_7 = arith.constant 0 : index
    %c0_8 = arith.constant 0 : index
    %c0_9 = arith.constant 0 : index
    %8 = vector.load %arg3[%c0_7, %c0_8, %c0_9] : memref<3x128x128xbf16, #tpu.memory_space<vmem>>, vector<1x128x128xbf16>
    %9 = vector.shape_cast %8 : vector<1x128x128xbf16> to vector<128x128xbf16>
    %cst_10 = arith.constant dense<0.000000e+00> : vector<10x128xf32>
    %10 = tpu.matmul %7, %9, %cst_10 {dimension_numbers = #tpu.dot_dimension_numbers<[1], [0], [0], [1], [0, 0, 1, 1], [], []>} : vector<10x128xbf16>, vector<128x128xbf16>, vector<10x128xf32> -> vector<10x128xf32>
    %11 = arith.addf %6, %10 : vector<10x128xf32>
    %c7 = arith.constant 7 : index
    %c0_11 = arith.constant 0 : index
    %12 = vector.load %arg10[%c7, %c0_11] : memref<24x256xbf16, #tpu.memory_space<vmem>>, vector<10x128xbf16>
    %c1 = arith.constant 1 : index
    %c0_12 = arith.constant 0 : index
    %c0_13 = arith.constant 0 : index
    %13 = vector.load %arg3[%c1, %c0_12, %c0_13] : memref<3x128x128xbf16, #tpu.memory_space<vmem>>, vector<1x128x128xbf16>
    %14 = vector.shape_cast %13 : vector<1x128x128xbf16> to vector<128x128xbf16>
    %cst_14 = arith.constant dense<0.000000e+00> : vector<10x128xf32>
    %15 = tpu.matmul %12, %14, %cst_14 {dimension_numbers = #tpu.dot_dimension_numbers<[1], [0], [0], [1], [0, 0, 1, 1], [], []>} : vector<10x128xbf16>, vector<128x128xbf16>, vector<10x128xf32> -> vector<10x128xf32>
    %16 = arith.addf %11, %15 : vector<10x128xf32>
    %c7_15 = arith.constant 7 : index
    %c128_16 = arith.constant 128 : index
    %17 = vector.load %arg10[%c7_15, %c128_16] : memref<24x256xbf16, #tpu.memory_space<vmem>>, vector<10x128xbf16>
    %c2 = arith.constant 2 : index
    %c0_17 = arith.constant 0 : index
    %c0_18 = arith.constant 0 : index
    %18 = vector.load %arg3[%c2, %c0_17, %c0_18] : memref<3x128x128xbf16, #tpu.memory_space<vmem>>, vector<1x128x128xbf16>
    %19 = vector.shape_cast %18 : vector<1x128x128xbf16> to vector<128x128xbf16>
    %cst_19 = arith.constant dense<0.000000e+00> : vector<10x128xf32>
    %20 = tpu.matmul %17, %19, %cst_19 {dimension_numbers = #tpu.dot_dimension_numbers<[1], [0], [0], [1], [0, 0, 1, 1], [], []>} : vector<10x128xbf16>, vector<128x128xbf16>, vector<10x128xf32> -> vector<10x128xf32>
    %21 = arith.addf %16, %20 : vector<10x128xf32>
    %c0_20 = arith.constant 0 : index
    %c0_21 = arith.constant 0 : index
    %22 = vector.load %arg4[%c0_20, %c0_21] : memref<1x128xf32, #tpu.memory_space<vmem>>, vector<1x128xf32>
    %23 = vector.broadcast %22 : vector<1x128xf32> to vector<10x128xf32>
    %24 = arith.addf %21, %23 : vector<10x128xf32>
    %cst_22 = arith.constant 0.000000e+00 : f32
    %25 = vector.broadcast %cst_22 : f32 to vector<10x128xf32>
    %26 = arith.maximumf %24, %25 : vector<10x128xf32>
    %27 = tpu.iota {dimensions = array<i32: 0>} : vector<10x1xi32>
    %c-1_i32 = arith.constant -1 : i32
    %28 = vector.broadcast %c-1_i32 : i32 to vector<10x1xi32>
    %29 = arith.addi %28, %27 : vector<10x1xi32>
    %c0_i32 = arith.constant 0 : i32
    %30 = vector.broadcast %c0_i32 : i32 to vector<10x1xi32>
    %31 = arith.cmpi sge, %29, %30 : vector<10x1xi32>
    %c8_i32 = arith.constant 8 : i32
    %32 = vector.broadcast %c8_i32 : i32 to vector<10x1xi32>
    %33 = arith.cmpi slt, %29, %32 : vector<10x1xi32>
    %34 = arith.andi %31, %33 : vector<10x1xi1>
    %cst_23 = arith.constant 0.000000e+00 : f32
    %35 = vector.shape_cast %34 : vector<10x1xi1> to vector<10x1xi1>
    %36 = vector.broadcast %35 : vector<10x1xi1> to vector<10x128xi1>
    %37 = vector.broadcast %cst_23 : f32 to vector<10x128xf32>
    %38 = arith.select %36, %26, %37 : vector<10x128xi1>, vector<10x128xf32>
    %39 = arith.truncf %38 : vector<10x128xf32> to vector<10x128xbf16>
    %c0_24 = arith.constant 0 : index
    %c0_25 = arith.constant 0 : index
    %40 = vector.load %arg11[%c0_24, %c0_25] : memref<10x128xbf16, #tpu.memory_space<vmem>>, vector<10x128xbf16>
    tpu.vector_store %arg11[%c0_24, %c0_25], %39 {strides = array<i32>} : memref<10x128xbf16, #tpu.memory_space<vmem>>, vector<10x128xbf16>,
    %c8_26 = arith.constant 8 : index
    %c0_27 = arith.constant 0 : index
    %41 = vector.load %arg10[%c8_26, %c0_27] : memref<24x256xbf16, #tpu.memory_space<vmem>>, vector<8x128xbf16>
    %c0_28 = arith.constant 0 : index
    %c0_29 = arith.constant 0 : index
    %c0_30 = arith.constant 0 : index
    %42 = vector.load %arg7[%c0_28, %c0_29, %c0_30] : memref<1x128x128xbf16, #tpu.memory_space<vmem>>, vector<1x128x128xbf16>
    %43 = vector.shape_cast %42 : vector<1x128x128xbf16> to vector<128x128xbf16>
    %cst_31 = arith.constant dense<0.000000e+00> : vector<8x128xf32>
    %44 = tpu.matmul %41, %43, %cst_31 {dimension_numbers = #tpu.dot_dimension_numbers<[1], [0], [0], [1], [0, 0, 1, 1], [], []>} : vector<8x128xbf16>, vector<128x128xbf16>, vector<8x128xf32> -> vector<8x128xf32>
    %c0_32 = arith.constant 0 : index
    %c0_33 = arith.constant 0 : index
    %45 = vector.load %arg8[%c0_32, %c0_33] : memref<1x128xf32, #tpu.memory_space<vmem>>, vector<1x128xf32>
    %46 = vector.broadcast %45 : vector<1x128xf32> to vector<8x128xf32>
    %47 = arith.addf %44, %46 : vector<8x128xf32>
    %cst_34 = arith.constant 0.000000e+00 : f32
    %48 = vector.broadcast %cst_34 : f32 to vector<8x128xf32>
    %c0_35 = arith.constant 0 : index
    %c0_36 = arith.constant 0 : index
    %49 = vector.load %arg11[%c0_35, %c0_36] : memref<10x128xbf16, #tpu.memory_space<vmem>>, vector<8x128xbf16>
    %c0_37 = arith.constant 0 : index
    %c0_38 = arith.constant 0 : index
    %c0_39 = arith.constant 0 : index
    %50 = vector.load %arg5[%c0_37, %c0_38, %c0_39] : memref<3x128x128xbf16, #tpu.memory_space<vmem>>, vector<1x128x128xbf16>
    %51 = vector.shape_cast %50 : vector<1x128x128xbf16> to vector<128x128xbf16>
    %cst_40 = arith.constant dense<0.000000e+00> : vector<8x128xf32>
    %52 = tpu.matmul %49, %51, %cst_40 {dimension_numbers = #tpu.dot_dimension_numbers<[1], [0], [0], [1], [0, 0, 1, 1], [], []>} : vector<8x128xbf16>, vector<128x128xbf16>, vector<8x128xf32> -> vector<8x128xf32>
    %53 = arith.addf %48, %52 : vector<8x128xf32>
    %c1_41 = arith.constant 1 : index
    %c0_42 = arith.constant 0 : index
    %54 = vector.load %arg11[%c1_41, %c0_42] : memref<10x128xbf16, #tpu.memory_space<vmem>>, vector<8x128xbf16>
    %c1_43 = arith.constant 1 : index
    %c0_44 = arith.constant 0 : index
    %c0_45 = arith.constant 0 : index
    %55 = vector.load %arg5[%c1_43, %c0_44, %c0_45] : memref<3x128x128xbf16, #tpu.memory_space<vmem>>, vector<1x128x128xbf16>
    %56 = vector.shape_cast %55 : vector<1x128x128xbf16> to vector<128x128xbf16>
    %cst_46 = arith.constant dense<0.000000e+00> : vector<8x128xf32>
    %57 = tpu.matmul %54, %56, %cst_46 {dimension_numbers = #tpu.dot_dimension_numbers<[1], [0], [0], [1], [0, 0, 1, 1], [], []>} : vector<8x128xbf16>, vector<128x128xbf16>, vector<8x128xf32> -> vector<8x128xf32>
    %58 = arith.addf %53, %57 : vector<8x128xf32>
    %c2_47 = arith.constant 2 : index
    %c0_48 = arith.constant 0 : index
    %59 = vector.load %arg11[%c2_47, %c0_48] : memref<10x128xbf16, #tpu.memory_space<vmem>>, vector<8x128xbf16>
    %c2_49 = arith.constant 2 : index
    %c0_50 = arith.constant 0 : index
    %c0_51 = arith.constant 0 : index
    %60 = vector.load %arg5[%c2_49, %c0_50, %c0_51] : memref<3x128x128xbf16, #tpu.memory_space<vmem>>, vector<1x128x128xbf16>
    %61 = vector.shape_cast %60 : vector<1x128x128xbf16> to vector<128x128xbf16>
    %cst_52 = arith.constant dense<0.000000e+00> : vector<8x128xf32>
    %62 = tpu.matmul %59, %61, %cst_52 {dimension_numbers = #tpu.dot_dimension_numbers<[1], [0], [0], [1], [0, 0, 1, 1], [], []>} : vector<8x128xbf16>, vector<128x128xbf16>, vector<8x128xf32> -> vector<8x128xf32>
    %63 = arith.addf %58, %62 : vector<8x128xf32>
    %c0_53 = arith.constant 0 : index
    %c0_54 = arith.constant 0 : index
    %64 = vector.load %arg6[%c0_53, %c0_54] : memref<1x128xf32, #tpu.memory_space<vmem>>, vector<1x128xf32>
    %65 = vector.broadcast %64 : vector<1x128xf32> to vector<8x128xf32>
    %66 = arith.addf %63, %65 : vector<8x128xf32>
    %67 = arith.addf %66, %47 : vector<8x128xf32>
    %cst_55 = arith.constant 0.000000e+00 : f32
    %68 = vector.broadcast %cst_55 : f32 to vector<8x128xf32>
    %69 = arith.maximumf %67, %68 : vector<8x128xf32>
    %70 = arith.truncf %69 : vector<8x128xf32> to vector<8x128xbf16>
    %c0_56 = arith.constant 0 : index
    %c0_57 = arith.constant 0 : index
    %c0_58 = arith.constant 0 : index
    %71 = vector.load %arg9[%c0_56, %c0_57, %c0_58] : memref<1x8x128xbf16, #tpu.memory_space<vmem>>, vector<1x8x128xbf16>
    %72 = vector.shape_cast %71 : vector<1x8x128xbf16> to vector<8x128xbf16>
    %73 = vector.shape_cast %70 : vector<8x128xbf16> to vector<1x8x128xbf16>
    tpu.vector_store %arg9[%c0_56, %c0_57, %c0_58], %73 {strides = array<i32>} : memref<1x8x128xbf16, #tpu.memory_space<vmem>>, vector<1x8x128xbf16>,
    return
  }
  func.func @transform_0(%arg0: i32, %arg1: i32) -> (i32, i32, i32) {
    %c0_i32 = arith.constant 0 : i32
    %c0_i32_0 = arith.constant 0 : i32
    %c0_i32_1 = arith.constant 0 : i32
    return %arg0, %c0_i32, %c0_i32_0 : i32, i32, i32
  }
  func.func @transform_1(%arg0: i32, %arg1: i32) -> (i32, i32, i32) {
    %c0_i32 = arith.constant 0 : i32
    %c0_i32_0 = arith.constant 0 : i32
    %c0_i32_1 = arith.constant 0 : i32
    %c0_i32_2 = arith.constant 0 : i32
    return %c0_i32, %c0_i32_0, %c0_i32_1 : i32, i32, i32
  }
  func.func @transform_2(%arg0: i32, %arg1: i32) -> (i32, i32) {
    %c0_i32 = arith.constant 0 : i32
    %c0_i32_0 = arith.constant 0 : i32
    %c0_i32_1 = arith.constant 0 : i32
    return %c0_i32, %c0_i32_0 : i32, i32
  }
  func.func @transform_3(%arg0: i32, %arg1: i32) -> (i32, i32, i32) {
    %c0_i32 = arith.constant 0 : i32
    %c0_i32_0 = arith.constant 0 : i32
    %c0_i32_1 = arith.constant 0 : i32
    %c0_i32_2 = arith.constant 0 : i32
    return %c0_i32, %c0_i32_0, %c0_i32_1 : i32, i32, i32
  }
  func.func @transform_4(%arg0: i32, %arg1: i32) -> (i32, i32) {
    %c0_i32 = arith.constant 0 : i32
    %c0_i32_0 = arith.constant 0 : i32
    %c0_i32_1 = arith.constant 0 : i32
    return %c0_i32, %c0_i32_0 : i32, i32
  }
  func.func @transform_5(%arg0: i32, %arg1: i32) -> (i32, i32, i32) {
    %c0_i32 = arith.constant 0 : i32
    %c0_i32_0 = arith.constant 0 : i32
    %c0_i32_1 = arith.constant 0 : i32
    %c0_i32_2 = arith.constant 0 : i32
    return %c0_i32, %c0_i32_0, %c0_i32_1 : i32, i32, i32
  }
  func.func @transform_6(%arg0: i32, %arg1: i32) -> (i32, i32) {
    %c0_i32 = arith.constant 0 : i32
    %c0_i32_0 = arith.constant 0 : i32
    %c0_i32_1 = arith.constant 0 : i32
    return %c0_i32, %c0_i32_0 : i32, i32
  }
  func.func @transform_7(%arg0: i32, %arg1: i32) -> (i32, i32, i32) {
    %c0_i32 = arith.constant 0 : i32
    %c0_i32_0 = arith.constant 0 : i32
    return %arg0, %arg1, %c0_i32 : i32, i32, i32
  }
}

</mosaic_0001>

<llo_original>
// kernel: _lambda_.3
$region0: #{_lambda_.3}
  #allocation0 [shape = 'u32[]', space=smem, size = 0x4, offset = 0x4, fixed_abs, tag = 'smem constant byte address 0x4 - core index']
  #allocation1 [shape = 'u32[144,128]{1,0:T(1,128)}', space=vmem, size = 0x12000, scoped, tag = 'internal scratch']
  #allocation2 [shape = 'bf16[24,256]{1,0:T(8,128)(2,1)}', space=vmem, size = 0x3000, scoped, tag = 'scratch operand']
  #allocation3 [shape = 'bf16[10,128]{1,0:T(8,128)(2,1)}', space=vmem, size = 0x1000, scoped, tag = 'scratch operand']
  %s0 = inlined_call_operand.vmem [shape: bf16[2,8,256], index: 0, kind: input, shape index: {}]
  %s1 = inlined_call_operand.vmem [shape: bf16[3,128,128], index: 1, kind: input, shape index: {}]
  %s2 = inlined_call_operand.vmem [shape: f32[1,128], index: 2, kind: input, shape index: {}, may-alias: {2,4,6}]
  %s3 = inlined_call_operand.vmem [shape: bf16[3,128,128], index: 3, kind: input, shape index: {}]
  %s4 = inlined_call_operand.vmem [shape: f32[1,128], index: 4, kind: input, shape index: {}, may-alias: {2,4,6}]
  %s5 = inlined_call_operand.vmem [shape: bf16[1,128,128], index: 5, kind: input, shape index: {}]
  %s6 = inlined_call_operand.vmem [shape: f32[1,128], index: 6, kind: input, shape index: {}, may-alias: {2,4,6}]
  %s7 = inlined_call_operand.vmem [shape: bf16[2,8,128], index: 7, kind: output, shape index: {}]
  %s8 = sld [smem:[#allocation0]]
  $region61: #{_lambda_.3} parent=0
    _
  %s10 = ssub.s32 1, %s8
  %s11 = scalar_select 0, %s10, %s8
  loop: start=0, step=1, limit=4
  $region2: #{_lambda_.3} parent=0 // loop_pre_header
    _
  $region3: #{_lambda_.3} parent=0 // loop_header
    %s13 = sphi 0, %s17
    %p14 = scmp.ge.s32.totalorder %s13, 4
    %s20 = sphi 0, %s32
    %s21 = sphi 0, %s28
    %s22 = sphi 0, %s20
    %s23 = sphi 0, %s21
    %s24 = sphi 0, %s22
    %s25 = sphi 0, %s23
    %s35 = sphi 0, %s37
    %s38 = sphi 0, %s35
    %s39 = sphi 0, %s38
    %s55 = sphi 0, %s39
    %s59 = sphi 0, %s59
    %s61 = sphi 0, %s59
    %s62 = sphi 0, %s61
    %s76 = sphi 0, %s62
    %s80 = sphi 0, %s80
    %s82 = sphi 0, %s80
    %s83 = sphi 0, %s82
    %s97 = sphi 0, %s83
    %s101 = sphi 0, %s101
    %s103 = sphi 0, %s101
    %s104 = sphi 0, %s103
    %s118 = sphi 0, %s104
    %s122 = sphi 0, %s122
    %s124 = sphi 0, %s122
    %s125 = sphi 0, %s124
    %s139 = sphi 0, %s125
    %s143 = sphi 0, %s143
    %s145 = sphi 0, %s143
    %s146 = sphi 0, %s145
    %s160 = sphi 0, %s146
    %s164 = sphi 0, %s164
    %s166 = sphi 0, %s164
    %s167 = sphi 0, %s166
    %s181 = sphi 0, %s167
    %s189 = sphi 0, %s191
    %s192 = sphi 0, %s189
    %s193 = sphi 0, %s192
    %s209 = sphi 0, %s193
  $region4: #{_lambda_.3} parent=0 // loop_header_branch
    %16 = sbr.rel (%p14) target = $region8
  $region5: #{_lambda_.3} parent=0 // loop_body
    %s18 = ssub.s32 %s13, 1
    %s19 = ssub.s32 %s13, 2
    %s26 = sadd.s32 1, %s21
    %p27 = scmp.ge.s32.totalorder %s26, 1
    %s28 = scalar_select %p27, 0, %s26
    %s29 = sadd.s32 1, %s20
    %s30 = scalar_select %p27, %s29, %s20
    %p31 = scmp.ge.s32.totalorder %s30, 2
    %s32 = scalar_select %p31, 0, %s30
    %s33 = ssub.s32 %s20, %s32
    %p34 = scmp.eq.s32.totalorder %s33, 0
    %s36 = sadd.s32 %s35, 1
    %s37 = scalar_select %p34, %s35, %s36
    %p40 = pneg %p34
    %p41 = scmp.eq.s32.totalorder %s13, 1
    %p42 = por %p40, %p41
    %p43 = scmp.ne.s32.totalorder %s35, %s38
    %p44 = scmp.eq.s32.totalorder %s13, 0
    %p45 = por %p43, %p44
    %p46 = scmp.ne.s32.totalorder %s35, %s38
    %p47 = scmp.eq.s32.totalorder %s18, 1
    %p48 = por %p46, %p47
    %p49 = scmp.ne.s32.totalorder %s38, %s39
    %p50 = scmp.eq.s32.totalorder %s18, 0
    %p51 = por %p49, %p50
    %p52 = scmp.ne.s32.totalorder %s38, %s39
    %p53 = scmp.eq.s32.totalorder %s19, 1
    %p54 = por %p52, %p53
    %p56 = scmp.ne.s32.totalorder %s39, %s55
    %p57 = scmp.eq.s32.totalorder %s19, 0
    %p58 = por %p56, %p57
    %s60 = sadd.s32 %s59, 1
    %p63 = scmp.eq.s32.totalorder %s13, 1
    %p64 = scmp.ne.s32.totalorder %s59, %s61
    %p65 = scmp.eq.s32.totalorder %s13, 0
    %p66 = por %p64, %p65
    %p67 = scmp.ne.s32.totalorder %s59, %s61
    %p68 = scmp.eq.s32.totalorder %s18, 1
    %p69 = por %p67, %p68
    %p70 = scmp.ne.s32.totalorder %s61, %s62
    %p71 = scmp.eq.s32.totalorder %s18, 0
    %p72 = por %p70, %p71
    %p73 = scmp.ne.s32.totalorder %s61, %s62
    %p74 = scmp.eq.s32.totalorder %s19, 1
    %p75 = por %p73, %p74
    %p77 = scmp.ne.s32.totalorder %s62, %s76
    %p78 = scmp.eq.s32.totalorder %s19, 0
    %p79 = por %p77, %p78
    %s81 = sadd.s32 %s80, 1
    %p84 = scmp.eq.s32.totalorder %s13, 1
    %p85 = scmp.ne.s32.totalorder %s80, %s82
    %p86 = scmp.eq.s32.totalorder %s13, 0
    %p87 = por %p85, %p86
    %p88 = scmp.ne.s32.totalorder %s80, %s82
    %p89 = scmp.eq.s32.totalorder %s18, 1
    %p90 = por %p88, %p89
    %p91 = scmp.ne.s32.totalorder %s82, %s83
    %p92 = scmp.eq.s32.totalorder %s18, 0
    %p93 = por %p91, %p92
    %p94 = scmp.ne.s32.totalorder %s82, %s83
    %p95 = scmp.eq.s32.totalorder %s19, 1
    %p96 = por %p94, %p95
    %p98 = scmp.ne.s32.totalorder %s83, %s97
    %p99 = scmp.eq.s32.totalorder %s19, 0
    %p100 = por %p98, %p99
    %s102 = sadd.s32 %s101, 1
    %p105 = scmp.eq.s32.totalorder %s13, 1
    %p106 = scmp.ne.s32.totalorder %s101, %s103
    %p107 = scmp.eq.s32.totalorder %s13, 0
    %p108 = por %p106, %p107
    %p109 = scmp.ne.s32.totalorder %s101, %s103
    %p110 = scmp.eq.s32.totalorder %s18, 1
    %p111 = por %p109, %p110
    %p112 = scmp.ne.s32.totalorder %s103, %s104
    %p113 = scmp.eq.s32.totalorder %s18, 0
    %p114 = por %p112, %p113
    %p115 = scmp.ne.s32.totalorder %s103, %s104
    %p116 = scmp.eq.s32.totalorder %s19, 1
    %p117 = por %p115, %p116
    %p119 = scmp.ne.s32.totalorder %s104, %s118
    %p120 = scmp.eq.s32.totalorder %s19, 0
    %p121 = por %p119, %p120
    %s123 = sadd.s32 %s122, 1
    %p126 = scmp.eq.s32.totalorder %s13, 1
    %p127 = scmp.ne.s32.totalorder %s122, %s124
    %p128 = scmp.eq.s32.totalorder %s13, 0
    %p129 = por %p127, %p128
    %p130 = scmp.ne.s32.totalorder %s122, %s124
    %p131 = scmp.eq.s32.totalorder %s18, 1
    %p132 = por %p130, %p131
    %p133 = scmp.ne.s32.totalorder %s124, %s125
    %p134 = scmp.eq.s32.totalorder %s18, 0
    %p135 = por %p133, %p134
    %p136 = scmp.ne.s32.totalorder %s124, %s125
    %p137 = scmp.eq.s32.totalorder %s19, 1
    %p138 = por %p136, %p137
    %p140 = scmp.ne.s32.totalorder %s125, %s139
    %p141 = scmp.eq.s32.totalorder %s19, 0
    %p142 = por %p140, %p141
    %s144 = sadd.s32 %s143, 1
    %p147 = scmp.eq.s32.totalorder %s13, 1
    %p148 = scmp.ne.s32.totalorder %s143, %s145
    %p149 = scmp.eq.s32.totalorder %s13, 0
    %p150 = por %p148, %p149
    %p151 = scmp.ne.s32.totalorder %s143, %s145
    %p152 = scmp.eq.s32.totalorder %s18, 1
    %p153 = por %p151, %p152
    %p154 = scmp.ne.s32.totalorder %s145, %s146
    %p155 = scmp.eq.s32.totalorder %s18, 0
    %p156 = por %p154, %p155
    %p157 = scmp.ne.s32.totalorder %s145, %s146
    %p158 = scmp.eq.s32.totalorder %s19, 1
    %p159 = por %p157, %p158
    %p161 = scmp.ne.s32.totalorder %s146, %s160
    %p162 = scmp.eq.s32.totalorder %s19, 0
    %p163 = por %p161, %p162
    %s165 = sadd.s32 %s164, 1
    %p168 = scmp.eq.s32.totalorder %s13, 1
    %p169 = scmp.ne.s32.totalorder %s164, %s166
    %p170 = scmp.eq.s32.totalorder %s13, 0
    %p171 = por %p169, %p170
    %p172 = scmp.ne.s32.totalorder %s164, %s166
    %p173 = scmp.eq.s32.totalorder %s18, 1
    %p174 = por %p172, %p173
    %p175 = scmp.ne.s32.totalorder %s166, %s167
    %p176 = scmp.eq.s32.totalorder %s18, 0
    %p177 = por %p175, %p176
    %p178 = scmp.ne.s32.totalorder %s166, %s167
    %p179 = scmp.eq.s32.totalorder %s19, 1
    %p180 = por %p178, %p179
    %p182 = scmp.ne.s32.totalorder %s167, %s181
    %p183 = scmp.eq.s32.totalorder %s19, 0
    %p184 = por %p182, %p183
    %s185 = ssub.s32 %s20, %s32
    %s186 = ssub.s32 %s21, %s28
    %s187 = sor.u32 %s185, %s186
    %p188 = scmp.eq.s32.totalorder %s187, 0
    %s190 = sadd.s32 %s189, 1
    %s191 = scalar_select %p188, %s189, %s190
    %p194 = pneg %p188
    %p195 = scmp.eq.s32.totalorder %s13, 1
    %p196 = por %p194, %p195
    %p197 = scmp.ne.s32.totalorder %s189, %s192
    %p198 = scmp.eq.s32.totalorder %s13, 0
    %p199 = por %p197, %p198
    %p200 = scmp.ne.s32.totalorder %s189, %s192
    %p201 = scmp.eq.s32.totalorder %s18, 1
    %p202 = por %p200, %p201
    %p203 = scmp.ne.s32.totalorder %s192, %s193
    %p204 = scmp.eq.s32.totalorder %s18, 0
    %p205 = por %p203, %p204
    %p206 = scmp.ne.s32.totalorder %s192, %s193
    %p207 = scmp.eq.s32.totalorder %s19, 1
    %p208 = por %p206, %p207
    %p210 = scmp.ne.s32.totalorder %s193, %s209
    %p211 = scmp.eq.s32.totalorder %s19, 0
    %p212 = por %p210, %p211
    %p213 = scmp.le.s32.totalorder 1, %s13
    %p214 = scmp.lt.s32.totalorder %s13, 3
    %p215 = pnand %p213, %p214
    %p216 = pneg %p215
    // Predicated region
    $region9: #{_lambda_.3} parent=5 // pred_check
      _
    $region10: #{_lambda_.3} parent=5 // pred_check_branch
      %218 = sbr.rel (%p215) target = $region12
    $region11: #{_lambda_.3} parent=5 // pred_region
      %s219 = ssub.s32 %s13, 1
      // Predicated region
      $region13: #{_lambda_.3} parent=11 // pred_check
        %p220 = pneg %p72
      $region14: #{_lambda_.3} parent=11 // pred_check_branch
        %222 = sbr.rel (%p220) target = $region16
      $region15: #{_lambda_.3} parent=11 // pred_region
        _
      $region16: #{_lambda_.3} parent=11 // pred_fallthru
        _
      // Predicated region
      $region17: #{_lambda_.3} parent=11 // pred_check
        %p223 = pneg %p93
      $region18: #{_lambda_.3} parent=11 // pred_check_branch
        %225 = sbr.rel (%p223) target = $region20
      $region19: #{_lambda_.3} parent=11 // pred_region
        _
      $region20: #{_lambda_.3} parent=11 // pred_fallthru
        _
      // Predicated region
      $region21: #{_lambda_.3} parent=11 // pred_check
        %p226 = pneg %p114
      $region22: #{_lambda_.3} parent=11 // pred_check_branch
        %228 = sbr.rel (%p226) target = $region24
      $region23: #{_lambda_.3} parent=11 // pred_region
        _
      $region24: #{_lambda_.3} parent=11 // pred_fallthru
        _
      // Predicated region
      $region25: #{_lambda_.3} parent=11 // pred_check
        %p229 = pneg %p135
      $region26: #{_lambda_.3} parent=11 // pred_check_branch
        %231 = sbr.rel (%p229) target = $region28
      $region27: #{_lambda_.3} parent=11 // pred_region
        _
      $region28: #{_lambda_.3} parent=11 // pred_fallthru
        _
      // Predicated region
      $region29: #{_lambda_.3} parent=11 // pred_check
        %p232 = pneg %p156
      $region30: #{_lambda_.3} parent=11 // pred_check_branch
        %234 = sbr.rel (%p232) target = $region32
      $region31: #{_lambda_.3} parent=11 // pred_region
        _
      $region32: #{_lambda_.3} parent=11 // pred_fallthru
        _
      // Predicated region
      $region33: #{_lambda_.3} parent=11 // pred_check
        %p235 = pneg %p177
      $region34: #{_lambda_.3} parent=11 // pred_check_branch
        %237 = sbr.rel (%p235) target = $region36
      $region35: #{_lambda_.3} parent=11 // pred_region
        _
      $region36: #{_lambda_.3} parent=11 // pred_fallthru
        _
    $region12: #{_lambda_.3} parent=5 // pred_fallthru
      _
    %p238 = scmp.lt.s32.totalorder %s13, 2
    // Predicated region
    $region37: #{_lambda_.3} parent=5 // pred_check
      %p239 = pneg %p238
    $region38: #{_lambda_.3} parent=5 // pred_check_branch
      %241 = sbr.rel (%p239) target = $region40
    $region39: #{_lambda_.3} parent=5 // pred_region
      // Predicated region
      $region41: #{_lambda_.3} parent=39 // pred_check
        %p242 = pneg %p45
      $region42: #{_lambda_.3} parent=39 // pred_check_branch
        %244 = sbr.rel (%p242) target = $region44
      $region43: #{_lambda_.3} parent=39 // pred_region
        %p245 = scmp.lt.s32.totalorder %s20, 1
        %s246 = scalar_select %p245, %s20, 1
        %s247 = smul.addr %s246, 2
        %s248 = smul.addr %s247, 4
        %s249 = scalar_lea.vmem %s0, %s248
      $region44: #{_lambda_.3} parent=39 // pred_fallthru
        _
    $region40: #{_lambda_.3} parent=5 // pred_fallthru
      _
    %p250 = scmp.le.s32.totalorder 1, %s13
    %p251 = scmp.lt.s32.totalorder %s13, 3
    %p252 = pnand %p250, %p251
    %p253 = pneg %p252
    // Predicated region
    $region45: #{_lambda_.3} parent=5 // pred_check
      _
    $region46: #{_lambda_.3} parent=5 // pred_check_branch
      %255 = sbr.rel (%p252) target = $region48
    $region47: #{_lambda_.3} parent=5 // pred_region
      %s256 = ssub.s32 %s13, 1
      %p257 = scmp.lt.s32.totalorder %s22, 1
      %s258 = scalar_select %p257, %s22, 1
      %s259 = smul.addr %s258, 2
      %s260 = smul.addr %s259, 4
      %s261 = scalar_lea.vmem %s0, %s260
      %p262 = pneg %p51
      %p263 = pneg %p48
      %p264 = pneg %p72
      %p265 = pneg %p69
      %p266 = pneg %p93
      %p267 = pneg %p90
      %p268 = pneg %p114
      %p269 = pneg %p111
      %p270 = pneg %p135
      %p271 = pneg %p132
      %p272 = pneg %p156
      %p273 = pneg %p153
      %p274 = pneg %p177
      %p275 = pneg %p174
      %p276 = pneg %p205
      %p277 = pneg %p202
      %p278 = scmp.lt.s32.totalorder %s22, 1
      %s279 = scalar_select %p278, %s22, 1
      %p280 = scmp.lt.s32.totalorder %s23, 0
      %s281 = scalar_select %p280, %s23, 0
      %s282 = sadd.s32 %s281, %s279
      %s283 = smul.addr %s282, 4
      %s284 = scalar_lea.vmem %s7, %s283
      %p285 = scmp.lt.s32.totalorder %s22, 1
      %s286 = scalar_select %p285, %s22, 1
      %s287 = smul.addr %s286, 2
      %s288 = smul.addr %s287, 4
      %s289 = scalar_lea.vmem %s0, %s288
      %p290 = scmp.lt.s32.totalorder %s22, 1
      %s291 = scalar_select %p290, %s22, 1
      %p292 = scmp.lt.s32.totalorder %s23, 0
      %s293 = scalar_select %p292, %s23, 0
      %s294 = sadd.s32 %s293, %s291
      %s295 = smul.addr %s294, 4
      %s296 = scalar_lea.vmem %s7, %s295
      %298 = vst [vmem:[#allocation2] sm:$0xff] 0
      %299 = vst [vmem:[#allocation2 + $0x10] sm:$0xff] 0
      %v300 = vld [vmem:[%s289] sm:$0xff]
      %301 = vst [vmem:[#allocation2 + $0x8] sm:$0xff] %v300
      %v302 = vld [vmem:[#allocation2 + $0x4] sm:$0x8]
      %v303 = vld [vmem:[#allocation2 + $0xc] sm:$0xf]
      %v304 = vld [vmem:[%s1] sm:$0xf]
      %v305 = vld [vmem:[%s1 + $0x4] sm:$0xf]
      %v306 = vld [vmem:[%s1 + $0x8] sm:$0xf]
      %v307 = vld [vmem:[%s1 + $0xc] sm:$0xf]
      %v308 = vld [vmem:[%s1 + $0x10] sm:$0xf]
      %v309 = vld [vmem:[%s1 + $0x14] sm:$0xf]
      %v310 = vld [vmem:[%s1 + $0x18] sm:$0xf]
      %v311 = vld [vmem:[%s1 + $0x1c] sm:$0xf]
      %v312 = vld [vmem:[%s1 + $0x20] sm:$0xf]
      %v313 = vld [vmem:[%s1 + $0x24] sm:$0xf]
      %v314 = vld [vmem:[%s1 + $0x28] sm:$0xf]
      %v315 = vld [vmem:[%s1 + $0x2c] sm:$0xf]
      %v316 = vld [vmem:[%s1 + $0x30] sm:$0xf]
      %v317 = vld [vmem:[%s1 + $0x34] sm:$0xf]
      %v318 = vld [vmem:[%s1 + $0x38] sm:$0xf]
      %v319 = vld [vmem:[%s1 + $0x3c] sm:$0xf]
      %v320 = vld [vmem:[#allocation2] sm:$0x8]
      %v321 = vld [vmem:[#allocation2 + $0x8] sm:$0xf]
      %v322 = vld [vmem:[#allocation2 + $0x10] sm:$0x1]
      %s323 = scalar_lea.vmem %s1, 64
      %v324 = vld [vmem:[%s323] sm:$0xf]
      %v325 = vld [vmem:[%s323 + $0x4] sm:$0xf]
      %v326 = vld [vmem:[%s323 + $0x8] sm:$0xf]
      %v327 = vld [vmem:[%s323 + $0xc] sm:$0xf]
      %v328 = vld [vmem:[%s323 + $0x10] sm:$0xf]
      %v329 = vld [vmem:[%s323 + $0x14] sm:$0xf]
      %v330 = vld [vmem:[%s323 + $0x18] sm:$0xf]
      %v331 = vld [vmem:[%s323 + $0x1c] sm:$0xf]
      %v332 = vld [vmem:[%s323 + $0x20] sm:$0xf]
      %v333 = vld [vmem:[%s323 + $0x24] sm:$0xf]
      %v334 = vld [vmem:[%s323 + $0x28] sm:$0xf]
      %v335 = vld [vmem:[%s323 + $0x2c] sm:$0xf]
      %v336 = vld [vmem:[%s323 + $0x30] sm:$0xf]
      %v337 = vld [vmem:[%s323 + $0x34] sm:$0xf]
      %v338 = vld [vmem:[%s323 + $0x38] sm:$0xf]
      %v339 = vld [vmem:[%s323 + $0x3c] sm:$0xf]
      %v343 = vunpack.c.l.b16 %v320
      %v344 = vunpack.c.l.b16 %v321
      %v345 = vunpack.c.l.b16 %v322
      %v346 = vpack.c.b16 %v344, %v343
      %v347 = vpack.c.b16 %v345, %v345
      %vm348 = vsmask.f32 4352
      %v350 = vshrl.u32 %v346, 16
      %v352 = vrot.slane %v350, 3
      %v353 = vshll.u32 %v346, 16
      %v355 = vrot.slane %v353, 4
      %v356 = vor.u32 %v352, %v355
      %v358 = vshll.u32 %v347, 16
      %v360 = vrot.slane %v358, 4
      %v361 = vsel %vm348, %v356, %v360
      %v379 = vunpack.c.l.b16 %v324
      %v380 = vunpack.c.l.b16 %v325
      %v381 = vunpack.c.l.b16 %v326
      %v382 = vunpack.c.l.b16 %v327
      %v383 = vunpack.c.l.b16 %v328
      %v384 = vunpack.c.l.b16 %v329
      %v385 = vunpack.c.l.b16 %v330
      %v386 = vunpack.c.l.b16 %v331
      %v387 = vunpack.c.l.b16 %v332
      %v388 = vunpack.c.l.b16 %v333
      %v389 = vunpack.c.l.b16 %v334
      %v390 = vunpack.c.l.b16 %v335
      %v391 = vunpack.c.l.b16 %v336
      %v392 = vunpack.c.l.b16 %v337
      %v393 = vunpack.c.l.b16 %v338
      %v394 = vunpack.c.l.b16 %v339
      %v395 = vpack.c.b16 %v380, %v379
      %v396 = vpack.c.b16 %v382, %v381
      %v397 = vpack.c.b16 %v384, %v383
      %v398 = vpack.c.b16 %v386, %v385
      %v399 = vpack.c.b16 %v388, %v387
      %v400 = vpack.c.b16 %v390, %v389
      %v401 = vpack.c.b16 %v392, %v391
      %v402 = vpack.c.b16 %v394, %v393
      %411 = vmatprep.subr.bf16.mxu0 0
      %412 = vmatpush1.bf16.msra.mxu0 %v402
      %413 = vmatprep.subr.bf16.mxu0 0
      %414 = vmatpush1.bf16.msra.mxu0 %v401
      %415 = vmatprep.subr.bf16.mxu0 0
      %416 = vmatpush1.bf16.msra.mxu0 %v400
      %417 = vmatprep.subr.bf16.mxu0 0
      %418 = vmatpush1.bf16.msra.mxu0 %v399
      %419 = vmatprep.subr.bf16.mxu0 0
      %420 = vmatpush1.bf16.msra.mxu0 %v398
      %421 = vmatprep.subr.bf16.mxu0 0
      %422 = vmatpush1.bf16.msra.mxu0 %v397
      %423 = vmatprep.subr.bf16.mxu0 0
      %424 = vmatpush1.bf16.msra.mxu0 %v396
      %425 = vmatprep.subr.bf16.mxu0 0
      %426 = vmatpush1.bf16.msra.mxu0 %v395
      %427 = vmatprep.subr.bf16.mxu0 0
      %428 = vmatpush2.bf16.msra.mxu0 0
      %429 = vmatprep.subr.bf16.mxu0 0
      %430 = vmatpush2.bf16.msra.mxu0 0
      %431 = vmatprep.subr.bf16.mxu0 0
      %432 = vmatpush2.bf16.msra.mxu0 0
      %433 = vmatprep.subr.bf16.mxu0 0
      %434 = vmatpush2.bf16.msra.mxu0 0
      %435 = vmatprep.subr.bf16.mxu0 0
      %436 = vmatpush2.bf16.msra.mxu0 0
      %437 = vmatprep.subr.bf16.mxu0 0
      %438 = vmatpush2.bf16.msra.mxu0 0
      %439 = vmatprep.subr.bf16.mxu0 0
      %440 = vmatpush2.bf16.msra.mxu0 0
      %441 = vmatprep.subr.bf16.mxu0 0
      %442 = vmatpush2.bf16.msra.mxu0 0
      %443 = vmatprep.mubr.bf16.mxu0 0
      %444 = vmatmul.mubr.bf16.gmra.mxu0 %v361
      %v445 = vpop.f32.mrf.mxu0
      %v446 = vadd.f32 0.0, %v445
      %v447 = vpop.f32.mrf.mxu0
      %v448 = vpop.f32.mrf.mxu0
      %v449 = vadd.f32 0.0, %v448
      %v450 = vpop.f32.mrf.mxu0
      %451 = vdwg.mxu0
      %v454 = vunpack.c.l.b16 %v302
      %v455 = vunpack.c.l.b16 %v303
      %v456 = vpack.c.b16 %v455, %v454
      %v457 = vrot.slane %v456, 3
      %v475 = vunpack.c.l.b16 %v304
      %v476 = vunpack.c.l.b16 %v305
      %v477 = vunpack.c.l.b16 %v306
      %v478 = vunpack.c.l.b16 %v307
      %v479 = vunpack.c.l.b16 %v308
      %v480 = vunpack.c.l.b16 %v309
      %v481 = vunpack.c.l.b16 %v310
      %v482 = vunpack.c.l.b16 %v311
      %v483 = vunpack.c.l.b16 %v312
      %v484 = vunpack.c.l.b16 %v313
      %v485 = vunpack.c.l.b16 %v314
      %v486 = vunpack.c.l.b16 %v315
      %v487 = vunpack.c.l.b16 %v316
      %v488 = vunpack.c.l.b16 %v317
      %v489 = vunpack.c.l.b16 %v318
      %v490 = vunpack.c.l.b16 %v319
      %v491 = vpack.c.b16 %v476, %v475
      %v492 = vpack.c.b16 %v478, %v477
      %v493 = vpack.c.b16 %v480, %v479
      %v494 = vpack.c.b16 %v482, %v481
      %v495 = vpack.c.b16 %v484, %v483
      %v496 = vpack.c.b16 %v486, %v485
      %v497 = vpack.c.b16 %v488, %v487
      %v498 = vpack.c.b16 %v490, %v489
      %507 = vmatprep.subr.bf16.mxu0 0
      %508 = vmatpush1.bf16.msra.mxu0 %v498
      %509 = vmatprep.subr.bf16.mxu0 0
      %510 = vmatpush1.bf16.msra.mxu0 %v497
      %511 = vmatprep.subr.bf16.mxu0 0
      %512 = vmatpush1.bf16.msra.mxu0 %v496
      %513 = vmatprep.subr.bf16.mxu0 0
      %514 = vmatpush1.bf16.msra.mxu0 %v495
      %515 = vmatprep.subr.bf16.mxu0 0
      %516 = vmatpush1.bf16.msra.mxu0 %v494
      %517 = vmatprep.subr.bf16.mxu0 0
      %518 = vmatpush1.bf16.msra.mxu0 %v493
      %519 = vmatprep.subr.bf16.mxu0 0
      %520 = vmatpush1.bf16.msra.mxu0 %v492
      %521 = vmatprep.subr.bf16.mxu0 0
      %522 = vmatpush1.bf16.msra.mxu0 %v491
      %523 = vmatprep.subr.bf16.mxu0 0
      %524 = vmatpush2.bf16.msra.mxu0 0
      %525 = vmatprep.subr.bf16.mxu0 0
      %526 = vmatpush2.bf16.msra.mxu0 0
      %527 = vmatprep.subr.bf16.mxu0 0
      %528 = vmatpush2.bf16.msra.mxu0 0
      %529 = vmatprep.subr.bf16.mxu0 0
      %530 = vmatpush2.bf16.msra.mxu0 0
      %531 = vmatprep.subr.bf16.mxu0 0
      %532 = vmatpush2.bf16.msra.mxu0 0
      %533 = vmatprep.subr.bf16.mxu0 0
      %534 = vmatpush2.bf16.msra.mxu0 0
      %535 = vmatprep.subr.bf16.mxu0 0
      %536 = vmatpush2.bf16.msra.mxu0 0
      %537 = vmatprep.subr.bf16.mxu0 0
      %538 = vmatpush2.bf16.msra.mxu0 0
      %539 = vmatprep.mubr.bf16.mxu0 0
      %540 = vmatmul.mubr.bf16.gmra.mxu0 %v457
      %v541 = vpop.f32.mrf.mxu0
      %v542 = vadd.f32 %v446, %v541
      %v543 = vpop.f32.mrf.mxu0
      %v544 = vpop.f32.mrf.mxu0
      %v545 = vadd.f32 %v449, %v544
      %v546 = vpop.f32.mrf.mxu0
      %547 = vdwg.mxu0
      %v548 = vld [vmem:[#allocation2 + $0x4] sm:$0x8]
      %v549 = vld [vmem:[#allocation2 + $0xc] sm:$0xf]
      %v550 = vld [vmem:[#allocation2 + $0x14] sm:$0x1]
      %s551 = scalar_lea.vmem %s1, 128
      %v552 = vld [vmem:[%s551] sm:$0xf]
      %v553 = vld [vmem:[%s551 + $0x4] sm:$0xf]
      %v554 = vld [vmem:[%s551 + $0x8] sm:$0xf]
      %v555 = vld [vmem:[%s551 + $0xc] sm:$0xf]
      %v556 = vld [vmem:[%s551 + $0x10] sm:$0xf]
      %v557 = vld [vmem:[%s551 + $0x14] sm:$0xf]
      %v558 = vld [vmem:[%s551 + $0x18] sm:$0xf]
      %v559 = vld [vmem:[%s551 + $0x1c] sm:$0xf]
      %v560 = vld [vmem:[%s551 + $0x20] sm:$0xf]
      %v561 = vld [vmem:[%s551 + $0x24] sm:$0xf]
      %v562 = vld [vmem:[%s551 + $0x28] sm:$0xf]
      %v563 = vld [vmem:[%s551 + $0x2c] sm:$0xf]
      %v564 = vld [vmem:[%s551 + $0x30] sm:$0xf]
      %v565 = vld [vmem:[%s551 + $0x34] sm:$0xf]
      %v566 = vld [vmem:[%s551 + $0x38] sm:$0xf]
      %v567 = vld [vmem:[%s551 + $0x3c] sm:$0xf]
      %v571 = vunpack.c.l.b16 %v548
      %v572 = vunpack.c.l.b16 %v549
      %v573 = vunpack.c.l.b16 %v550
      %v574 = vpack.c.b16 %v572, %v571
      %v575 = vpack.c.b16 %v573, %v573
      %v577 = vshrl.u32 %v574, 16
      %v579 = vrot.slane %v577, 3
      %v580 = vshll.u32 %v574, 16
      %v582 = vrot.slane %v580, 4
      %v583 = vor.u32 %v579, %v582
      %v585 = vshll.u32 %v575, 16
      %v587 = vrot.slane %v585, 4
      %v588 = vsel %vm348, %v583, %v587
      %v606 = vunpack.c.l.b16 %v552
      %v607 = vunpack.c.l.b16 %v553
      %v608 = vunpack.c.l.b16 %v554
      %v609 = vunpack.c.l.b16 %v555
      %v610 = vunpack.c.l.b16 %v556
      %v611 = vunpack.c.l.b16 %v557
      %v612 = vunpack.c.l.b16 %v558
      %v613 = vunpack.c.l.b16 %v559
      %v614 = vunpack.c.l.b16 %v560
      %v615 = vunpack.c.l.b16 %v561
      %v616 = vunpack.c.l.b16 %v562
      %v617 = vunpack.c.l.b16 %v563
      %v618 = vunpack.c.l.b16 %v564
      %v619 = vunpack.c.l.b16 %v565
      %v620 = vunpack.c.l.b16 %v566
      %v621 = vunpack.c.l.b16 %v567
      %v622 = vpack.c.b16 %v607, %v606
      %v623 = vpack.c.b16 %v609, %v608
      %v624 = vpack.c.b16 %v611, %v610
      %v625 = vpack.c.b16 %v613, %v612
      %v626 = vpack.c.b16 %v615, %v614
      %v627 = vpack.c.b16 %v617, %v616
      %v628 = vpack.c.b16 %v619, %v618
      %v629 = vpack.c.b16 %v621, %v620
      %638 = vmatprep.subr.bf16.mxu0 0
      %639 = vmatpush1.bf16.msra.mxu0 %v629
      %640 = vmatprep.subr.bf16.mxu0 0
      %641 = vmatpush1.bf16.msra.mxu0 %v628
      %642 = vmatprep.subr.bf16.mxu0 0
      %643 = vmatpush1.bf16.msra.mxu0 %v627
      %644 = vmatprep.subr.bf16.mxu0 0
      %645 = vmatpush1.bf16.msra.mxu0 %v626
      %646 = vmatprep.subr.bf16.mxu0 0
      %647 = vmatpush1.bf16.msra.mxu0 %v625
      %648 = vmatprep.subr.bf16.mxu0 0
      %649 = vmatpush1.bf16.msra.mxu0 %v624
      %650 = vmatprep.subr.bf16.mxu0 0
      %651 = vmatpush1.bf16.msra.mxu0 %v623
      %652 = vmatprep.subr.bf16.mxu0 0
      %653 = vmatpush1.bf16.msra.mxu0 %v622
      %654 = vmatprep.subr.bf16.mxu0 0
      %655 = vmatpush2.bf16.msra.mxu0 0
      %656 = vmatprep.subr.bf16.mxu0 0
      %657 = vmatpush2.bf16.msra.mxu0 0
      %658 = vmatprep.subr.bf16.mxu0 0
      %659 = vmatpush2.bf16.msra.mxu0 0
      %660 = vmatprep.subr.bf16.mxu0 0
      %661 = vmatpush2.bf16.msra.mxu0 0
      %662 = vmatprep.subr.bf16.mxu0 0
      %663 = vmatpush2.bf16.msra.mxu0 0
      %664 = vmatprep.subr.bf16.mxu0 0
      %665 = vmatpush2.bf16.msra.mxu0 0
      %666 = vmatprep.subr.bf16.mxu0 0
      %667 = vmatpush2.bf16.msra.mxu0 0
      %668 = vmatprep.subr.bf16.mxu0 0
      %669 = vmatpush2.bf16.msra.mxu0 0
      %670 = vmatprep.mubr.bf16.mxu0 0
      %671 = vmatmul.mubr.bf16.gmra.mxu0 %v588
      %v672 = vpop.f32.mrf.mxu0
      %v673 = vadd.f32 0.0, %v672
      %v674 = vpop.f32.mrf.mxu0
      %v675 = vpop.f32.mrf.mxu0
      %v676 = vadd.f32 0.0, %v675
      %v677 = vpop.f32.mrf.mxu0
      %678 = vdwg.mxu0
      %v679 = vadd.f32 %v542, %v673
      %v680 = vadd.f32 %v545, %v676
      %v681 = vld [vmem:[%s2] sm:$0x1]
      %v683 = vlaneseq
      %v684 = vshrl.u32 %v683, 7
      %v685 = vsub.s32 0, %v684
      %v686 = vrot.slane %v681, %v685
      %v688 = vadd.f32 %v679, %v686
      %v689 = vadd.f32 %v680, %v686
      %v690 = vmax.f32 %v688, 0.0
      %v691 = vmax.f32 %v689, 0.0
      %v692 = vlaneseq
      %v693 = vshrl.u32 %v692, 7
      %v694 = vadd.s32 %v693, 8
      %v695 = vadd.s32 %v693, 4294967295
      %v696 = vadd.s32 %v694, 4294967295
      %vm697 = vcmp.ge.s32.totalorder %v695, 0
      %vm698 = vcmp.ge.s32.totalorder %v696, 0
      %vm699 = vcmp.lt.s32.totalorder %v695, 8
      %vm700 = vcmp.lt.s32.totalorder %v696, 8
      %vm701 = vmand %vm697, %vm699
      %vm702 = vmand %vm698, %vm700
      %v703 = vsel %vm701, 1, 0
      %v704 = vsel %vm702, 1, 0
      %vm705 = vcmp.eq.s32.totalorder %v703, 1
      %vm706 = vcmp.eq.s32.totalorder %v704, 1
      %v707 = vsel %vm705, %v690, 0.0
      %v708 = vsel %vm706, %v691, 0.0
      %v709 = vpack.c.bf16 %v708, %v707
      %v711 = vunpack.c.l.b16 %v709
      %v712 = vunpack.c.h.b16 %v709
      %v713 = vpack.c.b16 %v711, %v711
      %v714 = vpack.c.b16 %v712, %v712
      %717 = vst [vmem:[#allocation3] sm:$0xf] %v713
      %718 = vst [vmem:[#allocation3 + $0x4] sm:$0x1] %v714
      %v719 = vld [vmem:[#allocation2 + $0x8] sm:$0xf]
      %v720 = vld [vmem:[%s5] sm:$0xf]
      %v721 = vld [vmem:[%s5 + $0x4] sm:$0xf]
      %v722 = vld [vmem:[%s5 + $0x8] sm:$0xf]
      %v723 = vld [vmem:[%s5 + $0xc] sm:$0xf]
      %v724 = vld [vmem:[%s5 + $0x10] sm:$0xf]
      %v725 = vld [vmem:[%s5 + $0x14] sm:$0xf]
      %v726 = vld [vmem:[%s5 + $0x18] sm:$0xf]
      %v727 = vld [vmem:[%s5 + $0x1c] sm:$0xf]
      %v728 = vld [vmem:[%s5 + $0x20] sm:$0xf]
      %v729 = vld [vmem:[%s5 + $0x24] sm:$0xf]
      %v730 = vld [vmem:[%s5 + $0x28] sm:$0xf]
      %v731 = vld [vmem:[%s5 + $0x2c] sm:$0xf]
      %v732 = vld [vmem:[%s5 + $0x30] sm:$0xf]
      %v733 = vld [vmem:[%s5 + $0x34] sm:$0xf]
      %v734 = vld [vmem:[%s5 + $0x38] sm:$0xf]
      %v735 = vld [vmem:[%s5 + $0x3c] sm:$0xf]
      %v736 = vld [vmem:[%s6] sm:$0x1]
      %v738 = vlaneseq
      %v739 = vshrl.u32 %v738, 7
      %v740 = vsub.s32 0, %v739
      %v741 = vrot.slane %v736, %v740
      %v759 = vunpack.c.l.b16 %v720
      %v760 = vunpack.c.l.b16 %v721
      %v761 = vunpack.c.l.b16 %v722
      %v762 = vunpack.c.l.b16 %v723
      %v763 = vunpack.c.l.b16 %v724
      %v764 = vunpack.c.l.b16 %v725
      %v765 = vunpack.c.l.b16 %v726
      %v766 = vunpack.c.l.b16 %v727
      %v767 = vunpack.c.l.b16 %v728
      %v768 = vunpack.c.l.b16 %v729
      %v769 = vunpack.c.l.b16 %v730
      %v770 = vunpack.c.l.b16 %v731
      %v771 = vunpack.c.l.b16 %v732
      %v772 = vunpack.c.l.b16 %v733
      %v773 = vunpack.c.l.b16 %v734
      %v774 = vunpack.c.l.b16 %v735
      %v775 = vpack.c.b16 %v760, %v759
      %v776 = vpack.c.b16 %v762, %v761
      %v777 = vpack.c.b16 %v764, %v763
      %v778 = vpack.c.b16 %v766, %v765
      %v779 = vpack.c.b16 %v768, %v767
      %v780 = vpack.c.b16 %v770, %v769
      %v781 = vpack.c.b16 %v772, %v771
      %v782 = vpack.c.b16 %v774, %v773
      %791 = vmatprep.subr.bf16.mxu0 0
      %792 = vmatpush1.bf16.msra.mxu0 %v782
      %793 = vmatprep.subr.bf16.mxu0 0
      %794 = vmatpush1.bf16.msra.mxu0 %v781
      %795 = vmatprep.subr.bf16.mxu0 0
      %796 = vmatpush1.bf16.msra.mxu0 %v780
      %797 = vmatprep.subr.bf16.mxu0 0
      %798 = vmatpush1.bf16.msra.mxu0 %v779
      %799 = vmatprep.subr.bf16.mxu0 0
      %800 = vmatpush1.bf16.msra.mxu0 %v778
      %801 = vmatprep.subr.bf16.mxu0 0
      %802 = vmatpush1.bf16.msra.mxu0 %v777
      %803 = vmatprep.subr.bf16.mxu0 0
      %804 = vmatpush1.bf16.msra.mxu0 %v776
      %805 = vmatprep.subr.bf16.mxu0 0
      %806 = vmatpush1.bf16.msra.mxu0 %v775
      %807 = vmatprep.subr.bf16.mxu0 0
      %808 = vmatpush2.bf16.msra.mxu0 0
      %809 = vmatprep.subr.bf16.mxu0 0
      %810 = vmatpush2.bf16.msra.mxu0 0
      %811 = vmatprep.subr.bf16.mxu0 0
      %812 = vmatpush2.bf16.msra.mxu0 0
      %813 = vmatprep.subr.bf16.mxu0 0
      %814 = vmatpush2.bf16.msra.mxu0 0
      %815 = vmatprep.subr.bf16.mxu0 0
      %816 = vmatpush2.bf16.msra.mxu0 0
      %817 = vmatprep.subr.bf16.mxu0 0
      %818 = vmatpush2.bf16.msra.mxu0 0
      %819 = vmatprep.subr.bf16.mxu0 0
      %820 = vmatpush2.bf16.msra.mxu0 0
      %821 = vmatprep.subr.bf16.mxu0 0
      %822 = vmatpush2.bf16.msra.mxu0 0
      %823 = vmatprep.mubr.bf16.mxu0 0
      %824 = vmatmul.mubr.bf16.gmra.mxu0 %v719
      %v825 = vpop.f32.mrf.mxu0
      %v826 = vadd.f32 %v741, %v825
      %v827 = vpop.f32.mrf.mxu0
      %v828 = vpop.f32.mrf.mxu0
      %v829 = vpop.f32.mrf.mxu0
      %830 = vdwg.mxu0
      %v831 = vld [vmem:[#allocation3] sm:$0xf]
      %v832 = vld [vmem:[%s3] sm:$0xf]
      %v833 = vld [vmem:[%s3 + $0x4] sm:$0xf]
      %v834 = vld [vmem:[%s3 + $0x8] sm:$0xf]
      %v835 = vld [vmem:[%s3 + $0xc] sm:$0xf]
      %v836 = vld [vmem:[%s3 + $0x10] sm:$0xf]
      %v837 = vld [vmem:[%s3 + $0x14] sm:$0xf]
      %v838 = vld [vmem:[%s3 + $0x18] sm:$0xf]
      %v839 = vld [vmem:[%s3 + $0x1c] sm:$0xf]
      %v840 = vld [vmem:[%s3 + $0x20] sm:$0xf]
      %v841 = vld [vmem:[%s3 + $0x24] sm:$0xf]
      %v842 = vld [vmem:[%s3 + $0x28] sm:$0xf]
      %v843 = vld [vmem:[%s3 + $0x2c] sm:$0xf]
      %v844 = vld [vmem:[%s3 + $0x30] sm:$0xf]
      %v845 = vld [vmem:[%s3 + $0x34] sm:$0xf]
      %v846 = vld [vmem:[%s3 + $0x38] sm:$0xf]
      %v847 = vld [vmem:[%s3 + $0x3c] sm:$0xf]
      %v848 = vld [vmem:[#allocation3 + $0x4] sm:$0x1]
      %s849 = scalar_lea.vmem %s3, 64
      %v850 = vld [vmem:[%s849] sm:$0xf]
      %v851 = vld [vmem:[%s849 + $0x4] sm:$0xf]
      %v852 = vld [vmem:[%s849 + $0x8] sm:$0xf]
      %v853 = vld [vmem:[%s849 + $0xc] sm:$0xf]
      %v854 = vld [vmem:[%s849 + $0x10] sm:$0xf]
      %v855 = vld [vmem:[%s849 + $0x14] sm:$0xf]
      %v856 = vld [vmem:[%s849 + $0x18] sm:$0xf]
      %v857 = vld [vmem:[%s849 + $0x1c] sm:$0xf]
      %v858 = vld [vmem:[%s849 + $0x20] sm:$0xf]
      %v859 = vld [vmem:[%s849 + $0x24] sm:$0xf]
      %v860 = vld [vmem:[%s849 + $0x28] sm:$0xf]
      %v861 = vld [vmem:[%s849 + $0x2c] sm:$0xf]
      %v862 = vld [vmem:[%s849 + $0x30] sm:$0xf]
      %v863 = vld [vmem:[%s849 + $0x34] sm:$0xf]
      %v864 = vld [vmem:[%s849 + $0x38] sm:$0xf]
      %v865 = vld [vmem:[%s849 + $0x3c] sm:$0xf]
      %v868 = vunpack.c.l.b16 %v831
      %v869 = vunpack.c.l.b16 %v848
      %v870 = vpack.c.b16 %v869, %v868
      %v872 = vshrl.u32 %v870, 16
      %v874 = vshll.u32 %v870, 16
      %v876 = vrot.slane %v874, 1
      %v877 = vor.u32 %v872, %v876
      %v895 = vunpack.c.l.b16 %v850
      %v896 = vunpack.c.l.b16 %v851
      %v897 = vunpack.c.l.b16 %v852
      %v898 = vunpack.c.l.b16 %v853
      %v899 = vunpack.c.l.b16 %v854
      %v900 = vunpack.c.l.b16 %v855
      %v901 = vunpack.c.l.b16 %v856
      %v902 = vunpack.c.l.b16 %v857
      %v903 = vunpack.c.l.b16 %v858
      %v904 = vunpack.c.l.b16 %v859
      %v905 = vunpack.c.l.b16 %v860
      %v906 = vunpack.c.l.b16 %v861
      %v907 = vunpack.c.l.b16 %v862
      %v908 = vunpack.c.l.b16 %v863
      %v909 = vunpack.c.l.b16 %v864
      %v910 = vunpack.c.l.b16 %v865
      %v911 = vpack.c.b16 %v896, %v895
      %v912 = vpack.c.b16 %v898, %v897
      %v913 = vpack.c.b16 %v900, %v899
      %v914 = vpack.c.b16 %v902, %v901
      %v915 = vpack.c.b16 %v904, %v903
      %v916 = vpack.c.b16 %v906, %v905
      %v917 = vpack.c.b16 %v908, %v907
      %v918 = vpack.c.b16 %v910, %v909
      %927 = vmatprep.subr.bf16.mxu0 0
      %928 = vmatpush1.bf16.msra.mxu0 %v918
      %929 = vmatprep.subr.bf16.mxu0 0
      %930 = vmatpush1.bf16.msra.mxu0 %v917
      %931 = vmatprep.subr.bf16.mxu0 0
      %932 = vmatpush1.bf16.msra.mxu0 %v916
      %933 = vmatprep.subr.bf16.mxu0 0
      %934 = vmatpush1.bf16.msra.mxu0 %v915
      %935 = vmatprep.subr.bf16.mxu0 0
      %936 = vmatpush1.bf16.msra.mxu0 %v914
      %937 = vmatprep.subr.bf16.mxu0 0
      %938 = vmatpush1.bf16.msra.mxu0 %v913
      %939 = vmatprep.subr.bf16.mxu0 0
      %940 = vmatpush1.bf16.msra.mxu0 %v912
      %941 = vmatprep.subr.bf16.mxu0 0
      %942 = vmatpush1.bf16.msra.mxu0 %v911
      %943 = vmatprep.subr.bf16.mxu0 0
      %944 = vmatpush2.bf16.msra.mxu0 0
      %945 = vmatprep.subr.bf16.mxu0 0
      %946 = vmatpush2.bf16.msra.mxu0 0
      %947 = vmatprep.subr.bf16.mxu0 0
      %948 = vmatpush2.bf16.msra.mxu0 0
      %949 = vmatprep.subr.bf16.mxu0 0
      %950 = vmatpush2.bf16.msra.mxu0 0
      %951 = vmatprep.subr.bf16.mxu0 0
      %952 = vmatpush2.bf16.msra.mxu0 0
      %953 = vmatprep.subr.bf16.mxu0 0
      %954 = vmatpush2.bf16.msra.mxu0 0
      %955 = vmatprep.subr.bf16.mxu0 0
      %956 = vmatpush2.bf16.msra.mxu0 0
      %957 = vmatprep.subr.bf16.mxu0 0
      %958 = vmatpush2.bf16.msra.mxu0 0
      %959 = vmatprep.mubr.bf16.mxu0 0
      %960 = vmatmul.mubr.bf16.gmra.mxu0 %v877
      %v961 = vpop.f32.mrf.mxu0
      %v962 = vadd.f32 0.0, %v961
      %v963 = vpop.f32.mrf.mxu0
      %v964 = vpop.f32.mrf.mxu0
      %v965 = vpop.f32.mrf.mxu0
      %966 = vdwg.mxu0
      %v983 = vunpack.c.l.b16 %v832
      %v984 = vunpack.c.l.b16 %v833
      %v985 = vunpack.c.l.b16 %v834
      %v986 = vunpack.c.l.b16 %v835
      %v987 = vunpack.c.l.b16 %v836
      %v988 = vunpack.c.l.b16 %v837
      %v989 = vunpack.c.l.b16 %v838
      %v990 = vunpack.c.l.b16 %v839
      %v991 = vunpack.c.l.b16 %v840
      %v992 = vunpack.c.l.b16 %v841
      %v993 = vunpack.c.l.b16 %v842
      %v994 = vunpack.c.l.b16 %v843
      %v995 = vunpack.c.l.b16 %v844
      %v996 = vunpack.c.l.b16 %v845
      %v997 = vunpack.c.l.b16 %v846
      %v998 = vunpack.c.l.b16 %v847
      %v999 = vpack.c.b16 %v984, %v983
      %v1000 = vpack.c.b16 %v986, %v985
      %v1001 = vpack.c.b16 %v988, %v987
      %v1002 = vpack.c.b16 %v990, %v989
      %v1003 = vpack.c.b16 %v992, %v991
      %v1004 = vpack.c.b16 %v994, %v993
      %v1005 = vpack.c.b16 %v996, %v995
      %v1006 = vpack.c.b16 %v998, %v997
      %1015 = vmatprep.subr.bf16.mxu0 0
      %1016 = vmatpush1.bf16.msra.mxu0 %v1006
      %1017 = vmatprep.subr.bf16.mxu0 0
      %1018 = vmatpush1.bf16.msra.mxu0 %v1005
      %1019 = vmatprep.subr.bf16.mxu0 0
      %1020 = vmatpush1.bf16.msra.mxu0 %v1004
      %1021 = vmatprep.subr.bf16.mxu0 0
      %1022 = vmatpush1.bf16.msra.mxu0 %v1003
      %1023 = vmatprep.subr.bf16.mxu0 0
      %1024 = vmatpush1.bf16.msra.mxu0 %v1002
      %1025 = vmatprep.subr.bf16.mxu0 0
      %1026 = vmatpush1.bf16.msra.mxu0 %v1001
      %1027 = vmatprep.subr.bf16.mxu0 0
      %1028 = vmatpush1.bf16.msra.mxu0 %v1000
      %1029 = vmatprep.subr.bf16.mxu0 0
      %1030 = vmatpush1.bf16.msra.mxu0 %v999
      %1031 = vmatprep.subr.bf16.mxu0 0
      %1032 = vmatpush2.bf16.msra.mxu0 0
      %1033 = vmatprep.subr.bf16.mxu0 0
      %1034 = vmatpush2.bf16.msra.mxu0 0
      %1035 = vmatprep.subr.bf16.mxu0 0
      %1036 = vmatpush2.bf16.msra.mxu0 0
      %1037 = vmatprep.subr.bf16.mxu0 0
      %1038 = vmatpush2.bf16.msra.mxu0 0
      %1039 = vmatprep.subr.bf16.mxu0 0
      %1040 = vmatpush2.bf16.msra.mxu0 0
      %1041 = vmatprep.subr.bf16.mxu0 0
      %1042 = vmatpush2.bf16.msra.mxu0 0
      %1043 = vmatprep.subr.bf16.mxu0 0
      %1044 = vmatpush2.bf16.msra.mxu0 0
      %1045 = vmatprep.subr.bf16.mxu0 0
      %1046 = vmatpush2.bf16.msra.mxu0 0
      %1047 = vmatprep.mubr.bf16.mxu0 0
      %1048 = vmatmul.mubr.bf16.gmra.mxu0 %v831
      %v1049 = vpop.f32.mrf.mxu0
      %v1050 = vadd.f32 %v962, %v1049
      %v1051 = vpop.f32.mrf.mxu0
      %v1052 = vpop.f32.mrf.mxu0
      %v1053 = vpop.f32.mrf.mxu0
      %1054 = vdwg.mxu0
      %v1055 = vld [vmem:[#allocation3] sm:$0xe]
      %s1056 = scalar_lea.vmem %s3, 128
      %v1057 = vld [vmem:[%s1056] sm:$0xf]
      %v1058 = vld [vmem:[%s1056 + $0x4] sm:$0xf]
      %v1059 = vld [vmem:[%s1056 + $0x8] sm:$0xf]
      %v1060 = vld [vmem:[%s1056 + $0xc] sm:$0xf]
      %v1061 = vld [vmem:[%s1056 + $0x10] sm:$0xf]
      %v1062 = vld [vmem:[%s1056 + $0x14] sm:$0xf]
      %v1063 = vld [vmem:[%s1056 + $0x18] sm:$0xf]
      %v1064 = vld [vmem:[%s1056 + $0x1c] sm:$0xf]
      %v1065 = vld [vmem:[%s1056 + $0x20] sm:$0xf]
      %v1066 = vld [vmem:[%s1056 + $0x24] sm:$0xf]
      %v1067 = vld [vmem:[%s1056 + $0x28] sm:$0xf]
      %v1068 = vld [vmem:[%s1056 + $0x2c] sm:$0xf]
      %v1069 = vld [vmem:[%s1056 + $0x30] sm:$0xf]
      %v1070 = vld [vmem:[%s1056 + $0x34] sm:$0xf]
      %v1071 = vld [vmem:[%s1056 + $0x38] sm:$0xf]
      %v1072 = vld [vmem:[%s1056 + $0x3c] sm:$0xf]
      %v1074 = vunpack.c.l.b16 %v1055
      %v1075 = vpack.c.b16 %v869, %v1074
      %v1076 = vrot.slane %v1075, 1
      %v1094 = vunpack.c.l.b16 %v1057
      %v1095 = vunpack.c.l.b16 %v1058
      %v1096 = vunpack.c.l.b16 %v1059
      %v1097 = vunpack.c.l.b16 %v1060
      %v1098 = vunpack.c.l.b16 %v1061
      %v1099 = vunpack.c.l.b16 %v1062
      %v1100 = vunpack.c.l.b16 %v1063
      %v1101 = vunpack.c.l.b16 %v1064
      %v1102 = vunpack.c.l.b16 %v1065
      %v1103 = vunpack.c.l.b16 %v1066
      %v1104 = vunpack.c.l.b16 %v1067
      %v1105 = vunpack.c.l.b16 %v1068
      %v1106 = vunpack.c.l.b16 %v1069
      %v1107 = vunpack.c.l.b16 %v1070
      %v1108 = vunpack.c.l.b16 %v1071
      %v1109 = vunpack.c.l.b16 %v1072
      %v1110 = vpack.c.b16 %v1095, %v1094
      %v1111 = vpack.c.b16 %v1097, %v1096
      %v1112 = vpack.c.b16 %v1099, %v1098
      %v1113 = vpack.c.b16 %v1101, %v1100
      %v1114 = vpack.c.b16 %v1103, %v1102
      %v1115 = vpack.c.b16 %v1105, %v1104
      %v1116 = vpack.c.b16 %v1107, %v1106
      %v1117 = vpack.c.b16 %v1109, %v1108
      %1126 = vmatprep.subr.bf16.mxu0 0
      %1127 = vmatpush1.bf16.msra.mxu0 %v1117
      %1128 = vmatprep.subr.bf16.mxu0 0
      %1129 = vmatpush1.bf16.msra.mxu0 %v1116
      %1130 = vmatprep.subr.bf16.mxu0 0
      %1131 = vmatpush1.bf16.msra.mxu0 %v1115
      %1132 = vmatprep.subr.bf16.mxu0 0
      %1133 = vmatpush1.bf16.msra.mxu0 %v1114
      %1134 = vmatprep.subr.bf16.mxu0 0
      %1135 = vmatpush1.bf16.msra.mxu0 %v1113
      %1136 = vmatprep.subr.bf16.mxu0 0
      %1137 = vmatpush1.bf16.msra.mxu0 %v1112
      %1138 = vmatprep.subr.bf16.mxu0 0
      %1139 = vmatpush1.bf16.msra.mxu0 %v1111
      %1140 = vmatprep.subr.bf16.mxu0 0
      %1141 = vmatpush1.bf16.msra.mxu0 %v1110
      %1142 = vmatprep.subr.bf16.mxu0 0
      %1143 = vmatpush2.bf16.msra.mxu0 0
      %1144 = vmatprep.subr.bf16.mxu0 0
      %1145 = vmatpush2.bf16.msra.mxu0 0
      %1146 = vmatprep.subr.bf16.mxu0 0
      %1147 = vmatpush2.bf16.msra.mxu0 0
      %1148 = vmatprep.subr.bf16.mxu0 0
      %1149 = vmatpush2.bf16.msra.mxu0 0
      %1150 = vmatprep.subr.bf16.mxu0 0
      %1151 = vmatpush2.bf16.msra.mxu0 0
      %1152 = vmatprep.subr.bf16.mxu0 0
      %1153 = vmatpush2.bf16.msra.mxu0 0
      %1154 = vmatprep.subr.bf16.mxu0 0
      %1155 = vmatpush2.bf16.msra.mxu0 0
      %1156 = vmatprep.subr.bf16.mxu0 0
      %1157 = vmatpush2.bf16.msra.mxu0 0
      %1158 = vmatprep.mubr.bf16.mxu0 0
      %1159 = vmatmul.mubr.bf16.gmra.mxu0 %v1076
      %v1160 = vpop.f32.mrf.mxu0
      %v1161 = vadd.f32 0.0, %v1160
      %v1162 = vpop.f32.mrf.mxu0
      %v1163 = vpop.f32.mrf.mxu0
      %v1164 = vpop.f32.mrf.mxu0
      %1165 = vdwg.mxu0
      %v1166 = vadd.f32 %v1050, %v1161
      %v1167 = vld [vmem:[%s4] sm:$0x1]
      %v1169 = vlaneseq
      %v1170 = vshrl.u32 %v1169, 7
      %v1171 = vsub.s32 0, %v1170
      %v1172 = vrot.slane %v1167, %v1171
      %v1174 = vadd.f32 %v1166, %v1172
      %v1175 = vadd.f32 %v1174, %v826
      %v1176 = vmax.f32 %v1175, 0.0
      %v1177 = vpack.c.bf16 %v1176, %v1176
      %1178 = vst [vmem:[%s296] sm:$0xf] %v1177
      %p1179 = scmp.lt.s32.totalorder %s22, 1
      %s1180 = scalar_select %p1179, %s22, 1
      %p1181 = scmp.lt.s32.totalorder %s23, 0
      %s1182 = scalar_select %p1181, %s23, 0
      %s1183 = sadd.s32 %s1182, %s1180
      %s1184 = smul.addr %s1183, 4
      %s1185 = scalar_lea.vmem %s7, %s1184
      // Predicated region
      $region49: #{_lambda_.3} parent=47 // pred_check
        %p1186 = pneg %p202
      $region50: #{_lambda_.3} parent=47 // pred_check_branch
        %1188 = sbr.rel (%p1186) target = $region52
      $region51: #{_lambda_.3} parent=47 // pred_region
        _
      $region52: #{_lambda_.3} parent=47 // pred_fallthru
        _
    $region48: #{_lambda_.3} parent=5 // pred_fallthru
      _
    %p1189 = scmp.le.s32.totalorder 2, %s13
    // Predicated region
    $region53: #{_lambda_.3} parent=5 // pred_check
      %p1190 = pneg %p1189
    $region54: #{_lambda_.3} parent=5 // pred_check_branch
      %1192 = sbr.rel (%p1190) target = $region56
    $region55: #{_lambda_.3} parent=5 // pred_region
      %s1193 = ssub.s32 %s13, 2
      // Predicated region
      $region57: #{_lambda_.3} parent=55 // pred_check
        %p1194 = pneg %p208
      $region58: #{_lambda_.3} parent=55 // pred_check_branch
        %1196 = sbr.rel (%p1194) target = $region60
      $region59: #{_lambda_.3} parent=55 // pred_region
        %p1197 = scmp.lt.s32.totalorder %s24, 1
        %s1198 = scalar_select %p1197, %s24, 1
        %p1199 = scmp.lt.s32.totalorder %s25, 0
        %s1200 = scalar_select %p1199, %s25, 0
        %s1201 = sadd.s32 %s1200, %s1198
        %s1202 = smul.addr %s1201, 4
        %s1203 = scalar_lea.vmem %s7, %s1202
      $region60: #{_lambda_.3} parent=55 // pred_fallthru
        _
    $region56: #{_lambda_.3} parent=5 // pred_fallthru
      _
  $region6: #{_lambda_.3} parent=0 // loop_footer
    %s17 = sadd.s32 1, %s13
  $region7: #{_lambda_.3} parent=0 // loop_footer_branch
    %12 = sbr.rel target = $region3
  $region8: #{_lambda_.3} parent=0 // loop_exit
    _

// kernel: _lambda_.2
$region0: #{_lambda_.2}
  #allocation0 [shape = 'u32[]', space=smem, size = 0x4, offset = 0x4, fixed_abs, tag = 'smem constant byte address 0x4 - core index']
  #allocation1 [shape = 'u32[144,128]{1,0:T(1,128)}', space=vmem, size = 0x12000, scoped, tag = 'internal scratch']
  #allocation2 [shape = 'bf16[32,128]{1,0:T(8,128)(2,1)}', space=vmem, size = 0x2000, scoped, tag = 'scratch operand']
  #allocation3 [shape = 'bf16[18,128]{1,0:T(8,128)(2,1)}', space=vmem, size = 0x1800, scoped, tag = 'scratch operand']
  %s0 = inlined_call_operand.vmem [shape: bf16[2,16,128], index: 0, kind: input, shape index: {}]
  %s1 = inlined_call_operand.hbm [shape: bf16[3,128,128], index: 1, kind: input, shape index: {}]
  %s2 = inlined_call_operand.vmem [shape: f32[1,128], index: 2, kind: input, shape index: {}, may-alias: {2,4}]
  %s3 = inlined_call_operand.hbm [shape: bf16[3,128,128], index: 3, kind: input, shape index: {}]
  %s4 = inlined_call_operand.vmem [shape: f32[1,128], index: 4, kind: input, shape index: {}, may-alias: {2,4}]
  %s5 = inlined_call_operand.vmem [shape: bf16[2,16,128], index: 5, kind: output, shape index: {}]
  %s6 = sld [smem:[#allocation0]]
  $region61: #{_lambda_.2} parent=0
    _
  %s8 = ssub.s32 1, %s6
  %s9 = scalar_select 0, %s8, %s6
  $region1: #{_lambda_.2} parent=0
    #allocation4 [shape = 'u8[98304]{0}', space=vmem, size = 0x18000, scoped, tag = 'input window, operand 1, single buffered']
    #allocation5 [shape = 's32[2]{0}', space=sflag, size = 0x8, scoped, tag = 'scoped memory for _lambda_.2']
    #allocation6 [shape = 'u8[98304]{0}', space=vmem, size = 0x18000, scoped, tag = 'input window, operand 3, single buffered']
    #allocation7 [shape = 's32[1]{0}', space=sflag, size = 0x4, scoped, tag = 'scoped memory for _lambda_.2']
    %10 = vsyncpa [#allocation5], 0
    %11 = vsyncpa [#allocation7], 0
    loop: start=0, step=1, limit=4
    $region2: #{_lambda_.2} parent=1 // loop_pre_header
      _
    $region3: #{_lambda_.2} parent=1 // loop_header
      %s13 = sphi 0, %s17
      %p14 = scmp.ge.s32.totalorder %s13, 4
      %s20 = sphi 0, %s32
      %s21 = sphi 0, %s28
      %s22 = sphi 0, %s20
      %s23 = sphi 0, %s21
      %s24 = sphi 0, %s22
      %s25 = sphi 0, %s23
      %s35 = sphi 0, %s37
      %s38 = sphi 0, %s35
      %s39 = sphi 0, %s38
      %s55 = sphi 0, %s39
      %s59 = sphi 0, %s59
      %s61 = sphi 0, %s59
      %s62 = sphi 0, %s61
      %s76 = sphi 0, %s62
      %s80 = sphi 0, %s80
      %s82 = sphi 0, %s80
      %s83 = sphi 0, %s82
      %s97 = sphi 0, %s83
      %s101 = sphi 0, %s101
      %s103 = sphi 0, %s101
      %s104 = sphi 0, %s103
      %s118 = sphi 0, %s104
      %s122 = sphi 0, %s122
      %s124 = sphi 0, %s122
      %s125 = sphi 0, %s124
      %s139 = sphi 0, %s125
      %s147 = sphi 0, %s149
      %s150 = sphi 0, %s147
      %s151 = sphi 0, %s150
      %s167 = sphi 0, %s151
    $region4: #{_lambda_.2} parent=1 // loop_header_branch
      %16 = sbr.rel (%p14) target = $region8
    $region5: #{_lambda_.2} parent=1 // loop_body
      %s18 = ssub.s32 %s13, 1
      %s19 = ssub.s32 %s13, 2
      %s26 = sadd.s32 1, %s21
      %p27 = scmp.ge.s32.totalorder %s26, 1
      %s28 = scalar_select %p27, 0, %s26
      %s29 = sadd.s32 1, %s20
      %s30 = scalar_select %p27, %s29, %s20
      %p31 = scmp.ge.s32.totalorder %s30, 2
      %s32 = scalar_select %p31, 0, %s30
      %s33 = ssub.s32 %s20, %s32
      %p34 = scmp.eq.s32.totalorder %s33, 0
      %s36 = sadd.s32 %s35, 1
      %s37 = scalar_select %p34, %s35, %s36
      %p40 = pneg %p34
      %p41 = scmp.eq.s32.totalorder %s13, 1
      %p42 = por %p40, %p41
      %p43 = scmp.ne.s32.totalorder %s35, %s38
      %p44 = scmp.eq.s32.totalorder %s13, 0
      %p45 = por %p43, %p44
      %p46 = scmp.ne.s32.totalorder %s35, %s38
      %p47 = scmp.eq.s32.totalorder %s18, 1
      %p48 = por %p46, %p47
      %p49 = scmp.ne.s32.totalorder %s38, %s39
      %p50 = scmp.eq.s32.totalorder %s18, 0
      %p51 = por %p49, %p50
      %p52 = scmp.ne.s32.totalorder %s38, %s39
      %p53 = scmp.eq.s32.totalorder %s19, 1
      %p54 = por %p52, %p53
      %p56 = scmp.ne.s32.totalorder %s39, %s55
      %p57 = scmp.eq.s32.totalorder %s19, 0
      %p58 = por %p56, %p57
      %s60 = sadd.s32 %s59, 1
      %p63 = scmp.eq.s32.totalorder %s13, 1
      %p64 = scmp.ne.s32.totalorder %s59, %s61
      %p65 = scmp.eq.s32.totalorder %s13, 0
      %p66 = por %p64, %p65
      %p67 = scmp.ne.s32.totalorder %s59, %s61
      %p68 = scmp.eq.s32.totalorder %s18, 1
      %p69 = por %p67, %p68
      %p70 = scmp.ne.s32.totalorder %s61, %s62
      %p71 = scmp.eq.s32.totalorder %s18, 0
      %p72 = por %p70, %p71
      %p73 = scmp.ne.s32.totalorder %s61, %s62
      %p74 = scmp.eq.s32.totalorder %s19, 1
      %p75 = por %p73, %p74
      %p77 = scmp.ne.s32.totalorder %s62, %s76
      %p78 = scmp.eq.s32.totalorder %s19, 0
      %p79 = por %p77, %p78
      %s81 = sadd.s32 %s80, 1
      %p84 = scmp.eq.s32.totalorder %s13, 1
      %p85 = scmp.ne.s32.totalorder %s80, %s82
      %p86 = scmp.eq.s32.totalorder %s13, 0
      %p87 = por %p85, %p86
      %p88 = scmp.ne.s32.totalorder %s80, %s82
      %p89 = scmp.eq.s32.totalorder %s18, 1
      %p90 = por %p88, %p89
      %p91 = scmp.ne.s32.totalorder %s82, %s83
      %p92 = scmp.eq.s32.totalorder %s18, 0
      %p93 = por %p91, %p92
      %p94 = scmp.ne.s32.totalorder %s82, %s83
      %p95 = scmp.eq.s32.totalorder %s19, 1
      %p96 = por %p94, %p95
      %p98 = scmp.ne.s32.totalorder %s83, %s97
      %p99 = scmp.eq.s32.totalorder %s19, 0
      %p100 = por %p98, %p99
      %s102 = sadd.s32 %s101, 1
      %p105 = scmp.eq.s32.totalorder %s13, 1
      %p106 = scmp.ne.s32.totalorder %s101, %s103
      %p107 = scmp.eq.s32.totalorder %s13, 0
      %p108 = por %p106, %p107
      %p109 = scmp.ne.s32.totalorder %s101, %s103
      %p110 = scmp.eq.s32.totalorder %s18, 1
      %p111 = por %p109, %p110
      %p112 = scmp.ne.s32.totalorder %s103, %s104
      %p113 = scmp.eq.s32.totalorder %s18, 0
      %p114 = por %p112, %p113
      %p115 = scmp.ne.s32.totalorder %s103, %s104
      %p116 = scmp.eq.s32.totalorder %s19, 1
      %p117 = por %p115, %p116
      %p119 = scmp.ne.s32.totalorder %s104, %s118
      %p120 = scmp.eq.s32.totalorder %s19, 0
      %p121 = por %p119, %p120
      %s123 = sadd.s32 %s122, 1
      %p126 = scmp.eq.s32.totalorder %s13, 1
      %p127 = scmp.ne.s32.totalorder %s122, %s124
      %p128 = scmp.eq.s32.totalorder %s13, 0
      %p129 = por %p127, %p128
      %p130 = scmp.ne.s32.totalorder %s122, %s124
      %p131 = scmp.eq.s32.totalorder %s18, 1
      %p132 = por %p130, %p131
      %p133 = scmp.ne.s32.totalorder %s124, %s125
      %p134 = scmp.eq.s32.totalorder %s18, 0
      %p135 = por %p133, %p134
      %p136 = scmp.ne.s32.totalorder %s124, %s125
      %p137 = scmp.eq.s32.totalorder %s19, 1
      %p138 = por %p136, %p137
      %p140 = scmp.ne.s32.totalorder %s125, %s139
      %p141 = scmp.eq.s32.totalorder %s19, 0
      %p142 = por %p140, %p141
      %s143 = ssub.s32 %s20, %s32
      %s144 = ssub.s32 %s21, %s28
      %s145 = sor.u32 %s143, %s144
      %p146 = scmp.eq.s32.totalorder %s145, 0
      %s148 = sadd.s32 %s147, 1
      %s149 = scalar_select %p146, %s147, %s148
      %p152 = pneg %p146
      %p153 = scmp.eq.s32.totalorder %s13, 1
      %p154 = por %p152, %p153
      %p155 = scmp.ne.s32.totalorder %s147, %s150
      %p156 = scmp.eq.s32.totalorder %s13, 0
      %p157 = por %p155, %p156
      %p158 = scmp.ne.s32.totalorder %s147, %s150
      %p159 = scmp.eq.s32.totalorder %s18, 1
      %p160 = por %p158, %p159
      %p161 = scmp.ne.s32.totalorder %s150, %s151
      %p162 = scmp.eq.s32.totalorder %s18, 0
      %p163 = por %p161, %p162
      %p164 = scmp.ne.s32.totalorder %s150, %s151
      %p165 = scmp.eq.s32.totalorder %s19, 1
      %p166 = por %p164, %p165
      %p168 = scmp.ne.s32.totalorder %s151, %s167
      %p169 = scmp.eq.s32.totalorder %s19, 0
      %p170 = por %p168, %p169
      %p171 = scmp.le.s32.totalorder 1, %s13
      %p172 = scmp.lt.s32.totalorder %s13, 3
      %p173 = pnand %p171, %p172
      %p174 = pneg %p173
      // Predicated region
      $region9: #{_lambda_.2} parent=5 // pred_check
        _
      $region10: #{_lambda_.2} parent=5 // pred_check_branch
        %176 = sbr.rel (%p173) target = $region12
      $region11: #{_lambda_.2} parent=5 // pred_region
        %s177 = ssub.s32 %s13, 1
        // Predicated region
        $region13: #{_lambda_.2} parent=11 // pred_check
          %p178 = pneg %p72
        $region14: #{_lambda_.2} parent=11 // pred_check_branch
          %180 = sbr.rel (%p178) target = $region16
        $region15: #{_lambda_.2} parent=11 // pred_region
          %s182 = ssub.s32 3072, 3072
          %183 = vsyncadd [#allocation5], %s182
          %s184 = sshll.u32 [#allocation4], 4
          %s185 = int_to_ptr.vmem [resolvable:$true] %s184
          %190 = dma.hbm_to_vmem [thread:$0]  %s1, 3072, %s185, [#allocation5], 64, 64, 4
        $region16: #{_lambda_.2} parent=11 // pred_fallthru
          _
        // Predicated region
        $region17: #{_lambda_.2} parent=11 // pred_check
          %p191 = pneg %p93
        $region18: #{_lambda_.2} parent=11 // pred_check_branch
          %193 = sbr.rel (%p191) target = $region20
        $region19: #{_lambda_.2} parent=11 // pred_region
          _
        $region20: #{_lambda_.2} parent=11 // pred_fallthru
          _
        // Predicated region
        $region21: #{_lambda_.2} parent=11 // pred_check
          %p194 = pneg %p114
        $region22: #{_lambda_.2} parent=11 // pred_check_branch
          %196 = sbr.rel (%p194) target = $region24
        $region23: #{_lambda_.2} parent=11 // pred_region
          %s198 = ssub.s32 3072, 3072
          %199 = vsyncadd [#allocation7], %s198
          %s200 = sshll.u32 [#allocation6], 4
          %s201 = int_to_ptr.vmem [resolvable:$true] %s200
          %206 = dma.hbm_to_vmem [thread:$0]  %s3, 3072, %s201, [#allocation7], 64, 64, 4
        $region24: #{_lambda_.2} parent=11 // pred_fallthru
          _
        // Predicated region
        $region25: #{_lambda_.2} parent=11 // pred_check
          %p207 = pneg %p135
        $region26: #{_lambda_.2} parent=11 // pred_check_branch
          %209 = sbr.rel (%p207) target = $region28
        $region27: #{_lambda_.2} parent=11 // pred_region
          _
        $region28: #{_lambda_.2} parent=11 // pred_fallthru
          _
      $region12: #{_lambda_.2} parent=5 // pred_fallthru
        _
      %p210 = scmp.lt.s32.totalorder %s13, 2
      // Predicated region
      $region29: #{_lambda_.2} parent=5 // pred_check
        %p211 = pneg %p210
      $region30: #{_lambda_.2} parent=5 // pred_check_branch
        %213 = sbr.rel (%p211) target = $region32
      $region31: #{_lambda_.2} parent=5 // pred_region
        // Predicated region
        $region33: #{_lambda_.2} parent=31 // pred_check
          %p214 = pneg %p45
        $region34: #{_lambda_.2} parent=31 // pred_check_branch
          %216 = sbr.rel (%p214) target = $region36
        $region35: #{_lambda_.2} parent=31 // pred_region
          %p217 = scmp.lt.s32.totalorder %s20, 1
          %s218 = scalar_select %p217, %s20, 1
          %s219 = smul.addr %s218, 2
          %s220 = smul.addr %s219, 4
          %s221 = scalar_lea.vmem %s0, %s220
        $region36: #{_lambda_.2} parent=31 // pred_fallthru
          _
      $region32: #{_lambda_.2} parent=5 // pred_fallthru
        _
      %p222 = scmp.le.s32.totalorder 1, %s13
      %p223 = scmp.lt.s32.totalorder %s13, 3
      %p224 = pnand %p222, %p223
      %p225 = pneg %p224
      // Predicated region
      $region37: #{_lambda_.2} parent=5 // pred_check
        _
      $region38: #{_lambda_.2} parent=5 // pred_check_branch
        %227 = sbr.rel (%p224) target = $region40
      $region39: #{_lambda_.2} parent=5 // pred_region
        %s228 = ssub.s32 %s13, 1
        // Predicated region
        $region41: #{_lambda_.2} parent=39 // pred_check
          %p229 = pneg %p72
        $region42: #{_lambda_.2} parent=39 // pred_check_branch
          %231 = sbr.rel (%p229) target = $region44
        $region43: #{_lambda_.2} parent=39 // pred_region
          %232 = dma.done [#allocation5], 3072
        $region44: #{_lambda_.2} parent=39 // pred_fallthru
          _
        // Predicated region
        $region45: #{_lambda_.2} parent=39 // pred_check
          %p233 = pneg %p114
        $region46: #{_lambda_.2} parent=39 // pred_check_branch
          %235 = sbr.rel (%p233) target = $region48
        $region47: #{_lambda_.2} parent=39 // pred_region
          %236 = dma.done [#allocation7], 3072
        $region48: #{_lambda_.2} parent=39 // pred_fallthru
          _
        %p237 = scmp.lt.s32.totalorder %s22, 1
        %s238 = scalar_select %p237, %s22, 1
        %s239 = smul.addr %s238, 2
        %s240 = smul.addr %s239, 4
        %s241 = scalar_lea.vmem %s0, %s240
        %p242 = pneg %p51
        %p243 = pneg %p48
        %p244 = pneg %p72
        %p245 = pneg %p69
        %p246 = pneg %p93
        %p247 = pneg %p90
        %p248 = pneg %p114
        %p249 = pneg %p111
        %p250 = pneg %p135
        %p251 = pneg %p132
        %p252 = pneg %p163
        %p253 = pneg %p160
        %s254 = smul.u32 2, %s23
        %p255 = scmp.lt.s32.totalorder %s22, 1
        %s256 = scalar_select %p255, %s22, 1
        %p257 = scmp.lt.s32.totalorder %s254, 1
        %s258 = scalar_select %p257, %s254, 1
        %s259 = smul.addr %s256, 2
        %s260 = sadd.s32 %s258, %s259
        %s261 = smul.addr %s260, 4
        %s262 = scalar_lea.vmem %s5, %s261
        %p263 = scmp.lt.s32.totalorder %s22, 1
        %s264 = scalar_select %p263, %s22, 1
        %s265 = smul.addr %s264, 2
        %s266 = smul.addr %s265, 4
        %s267 = scalar_lea.vmem %s0, %s266
        %s268 = smul.u32 2, %s23
        %p269 = scmp.lt.s32.totalorder %s22, 1
        %s270 = scalar_select %p269, %s22, 1
        %p271 = scmp.lt.s32.totalorder %s268, 1
        %s272 = scalar_select %p271, %s268, 1
        %s273 = smul.addr %s270, 2
        %s274 = sadd.s32 %s272, %s273
        %s275 = smul.addr %s274, 4
        %s276 = scalar_lea.vmem %s5, %s275
        %s277 = smul.u32 2, %s23
        %279 = vst [vmem:[#allocation2] sm:$0xf] 0
        %280 = vst [vmem:[#allocation2 + $0xc] sm:$0xf] 0
        %v281 = vld [vmem:[%s267] sm:$0xf]
        %v282 = vld [vmem:[%s267 + $0x4] sm:$0xf]
        %283 = vst [vmem:[#allocation2 + $0x4] sm:$0xf] %v281
        %284 = vst [vmem:[#allocation2 + $0x8] sm:$0xf] %v282
        %v285 = vld [vmem:[#allocation2] sm:$0x8]
        %v286 = vld [vmem:[#allocation2 + $0x4] sm:$0xf]
        %v287 = vld [vmem:[#allocation2 + $0x8] sm:$0xf]
        %v288 = vld [vmem:[#allocation4] sm:$0xf]
        %v289 = vld [vmem:[#allocation4 + $0x4] sm:$0xf]
        %v290 = vld [vmem:[#allocation4 + $0x8] sm:$0xf]
        %v291 = vld [vmem:[#allocation4 + $0xc] sm:$0xf]
        %v292 = vld [vmem:[#allocation4 + $0x10] sm:$0xf]
        %v293 = vld [vmem:[#allocation4 + $0x14] sm:$0xf]
        %v294 = vld [vmem:[#allocation4 + $0x18] sm:$0xf]
        %v295 = vld [vmem:[#allocation4 + $0x1c] sm:$0xf]
        %v296 = vld [vmem:[#allocation4 + $0x20] sm:$0xf]
        %v297 = vld [vmem:[#allocation4 + $0x24] sm:$0xf]
        %v298 = vld [vmem:[#allocation4 + $0x28] sm:$0xf]
        %v299 = vld [vmem:[#allocation4 + $0x2c] sm:$0xf]
        %v300 = vld [vmem:[#allocation4 + $0x30] sm:$0xf]
        %v301 = vld [vmem:[#allocation4 + $0x34] sm:$0xf]
        %v302 = vld [vmem:[#allocation4 + $0x38] sm:$0xf]
        %v303 = vld [vmem:[#allocation4 + $0x3c] sm:$0xf]
        %v304 = vld [vmem:[#allocation2] sm:$0x8]
        %v305 = vld [vmem:[#allocation2 + $0x4] sm:$0xf]
        %v306 = vld [vmem:[#allocation2 + $0x8] sm:$0xf]
        %v307 = vld [vmem:[#allocation2 + $0xc] sm:$0x1]
        %s308 = scalar_lea.vmem [#allocation4], 64
        %v309 = vld [vmem:[%s308] sm:$0xf]
        %v310 = vld [vmem:[%s308 + $0x4] sm:$0xf]
        %v311 = vld [vmem:[%s308 + $0x8] sm:$0xf]
        %v312 = vld [vmem:[%s308 + $0xc] sm:$0xf]
        %v313 = vld [vmem:[%s308 + $0x10] sm:$0xf]
        %v314 = vld [vmem:[%s308 + $0x14] sm:$0xf]
        %v315 = vld [vmem:[%s308 + $0x18] sm:$0xf]
        %v316 = vld [vmem:[%s308 + $0x1c] sm:$0xf]
        %v317 = vld [vmem:[%s308 + $0x20] sm:$0xf]
        %v318 = vld [vmem:[%s308 + $0x24] sm:$0xf]
        %v319 = vld [vmem:[%s308 + $0x28] sm:$0xf]
        %v320 = vld [vmem:[%s308 + $0x2c] sm:$0xf]
        %v321 = vld [vmem:[%s308 + $0x30] sm:$0xf]
        %v322 = vld [vmem:[%s308 + $0x34] sm:$0xf]
        %v323 = vld [vmem:[%s308 + $0x38] sm:$0xf]
        %v324 = vld [vmem:[%s308 + $0x3c] sm:$0xf]
        %v329 = vunpack.c.l.b16 %v304
        %v330 = vunpack.c.l.b16 %v305
        %v331 = vunpack.c.l.b16 %v306
        %v332 = vunpack.c.l.b16 %v307
        %v333 = vpack.c.b16 %v330, %v329
        %v334 = vpack.c.b16 %v332, %v331
        %vm335 = vsmask.f32 4352
        %v337 = vshrl.u32 %v333, 16
        %v339 = vrot.slane %v337, 3
        %v340 = vshll.u32 %v333, 16
        %v342 = vrot.slane %v340, 4
        %v343 = vor.u32 %v339, %v342
        %v345 = vshrl.u32 %v334, 16
        %v347 = vrot.slane %v345, 3
        %v348 = vshll.u32 %v334, 16
        %v350 = vrot.slane %v348, 4
        %v351 = vor.u32 %v347, %v350
        %v352 = vsel %vm335, %v343, %v351
        %v371 = vunpack.c.l.b16 %v309
        %v372 = vunpack.c.l.b16 %v310
        %v373 = vunpack.c.l.b16 %v311
        %v374 = vunpack.c.l.b16 %v312
        %v375 = vunpack.c.l.b16 %v313
        %v376 = vunpack.c.l.b16 %v314
        %v377 = vunpack.c.l.b16 %v315
        %v378 = vunpack.c.l.b16 %v316
        %v379 = vunpack.c.l.b16 %v317
        %v380 = vunpack.c.l.b16 %v318
        %v381 = vunpack.c.l.b16 %v319
        %v382 = vunpack.c.l.b16 %v320
        %v383 = vunpack.c.l.b16 %v321
        %v384 = vunpack.c.l.b16 %v322
        %v385 = vunpack.c.l.b16 %v323
        %v386 = vunpack.c.l.b16 %v324
        %v387 = vpack.c.b16 %v372, %v371
        %v388 = vpack.c.b16 %v374, %v373
        %v389 = vpack.c.b16 %v376, %v375
        %v390 = vpack.c.b16 %v378, %v377
        %v391 = vpack.c.b16 %v380, %v379
        %v392 = vpack.c.b16 %v382, %v381
        %v393 = vpack.c.b16 %v384, %v383
        %v394 = vpack.c.b16 %v386, %v385
        %403 = vmatprep.subr.bf16.mxu0 0
        %404 = vmatpush1.bf16.msra.mxu0 %v394
        %405 = vmatprep.subr.bf16.mxu0 0
        %406 = vmatpush1.bf16.msra.mxu0 %v393
        %407 = vmatprep.subr.bf16.mxu0 0
        %408 = vmatpush1.bf16.msra.mxu0 %v392
        %409 = vmatprep.subr.bf16.mxu0 0
        %410 = vmatpush1.bf16.msra.mxu0 %v391
        %411 = vmatprep.subr.bf16.mxu0 0
        %412 = vmatpush1.bf16.msra.mxu0 %v390
        %413 = vmatprep.subr.bf16.mxu0 0
        %414 = vmatpush1.bf16.msra.mxu0 %v389
        %415 = vmatprep.subr.bf16.mxu0 0
        %416 = vmatpush1.bf16.msra.mxu0 %v388
        %417 = vmatprep.subr.bf16.mxu0 0
        %418 = vmatpush1.bf16.msra.mxu0 %v387
        %419 = vmatprep.subr.bf16.mxu0 0
        %420 = vmatpush2.bf16.msra.mxu0 0
        %421 = vmatprep.subr.bf16.mxu0 0
        %422 = vmatpush2.bf16.msra.mxu0 0
        %423 = vmatprep.subr.bf16.mxu0 0
        %424 = vmatpush2.bf16.msra.mxu0 0
        %425 = vmatprep.subr.bf16.mxu0 0
        %426 = vmatpush2.bf16.msra.mxu0 0
        %427 = vmatprep.subr.bf16.mxu0 0
        %428 = vmatpush2.bf16.msra.mxu0 0
        %429 = vmatprep.subr.bf16.mxu0 0
        %430 = vmatpush2.bf16.msra.mxu0 0
        %431 = vmatprep.subr.bf16.mxu0 0
        %432 = vmatpush2.bf16.msra.mxu0 0
        %433 = vmatprep.subr.bf16.mxu0 0
        %434 = vmatpush2.bf16.msra.mxu0 0
        %435 = vmatprep.mubr.bf16.mxu0 0
        %436 = vmatmul.mubr.bf16.gmra.mxu0 %v352
        %v437 = vpop.f32.mrf.mxu0
        %v438 = vadd.f32 0.0, %v437
        %v439 = vpop.f32.mrf.mxu0
        %v440 = vpop.f32.mrf.mxu0
        %v441 = vadd.f32 0.0, %v440
        %v442 = vpop.f32.mrf.mxu0
        %443 = vmatprep.mubr.bf16.mxu0 0
        %444 = vmatmul.mubr.bf16.gmra.mxu0 %v351
        %v445 = vpop.f32.mrf.mxu0
        %v446 = vadd.f32 0.0, %v445
        %v447 = vpop.f32.mrf.mxu0
        %v448 = vpop.f32.mrf.mxu0
        %v449 = vpop.f32.mrf.mxu0
        %450 = vdwg.mxu0
        %v454 = vunpack.c.l.b16 %v285
        %v455 = vunpack.c.l.b16 %v286
        %v456 = vunpack.c.l.b16 %v287
        %v457 = vpack.c.b16 %v455, %v454
        %v458 = vpack.c.b16 %v456, %v456
        %vm459 = vcmask 1044480
        %v460 = vrot.slane %v457, 3
        %v461 = vrot.slane %v458, 3
        %v462 = vsel %vm459, %v460, %v461
        %v481 = vunpack.c.l.b16 %v288
        %v482 = vunpack.c.l.b16 %v289
        %v483 = vunpack.c.l.b16 %v290
        %v484 = vunpack.c.l.b16 %v291
        %v485 = vunpack.c.l.b16 %v292
        %v486 = vunpack.c.l.b16 %v293
        %v487 = vunpack.c.l.b16 %v294
        %v488 = vunpack.c.l.b16 %v295
        %v489 = vunpack.c.l.b16 %v296
        %v490 = vunpack.c.l.b16 %v297
        %v491 = vunpack.c.l.b16 %v298
        %v492 = vunpack.c.l.b16 %v299
        %v493 = vunpack.c.l.b16 %v300
        %v494 = vunpack.c.l.b16 %v301
        %v495 = vunpack.c.l.b16 %v302
        %v496 = vunpack.c.l.b16 %v303
        %v497 = vpack.c.b16 %v482, %v481
        %v498 = vpack.c.b16 %v484, %v483
        %v499 = vpack.c.b16 %v486, %v485
        %v500 = vpack.c.b16 %v488, %v487
        %v501 = vpack.c.b16 %v490, %v489
        %v502 = vpack.c.b16 %v492, %v491
        %v503 = vpack.c.b16 %v494, %v493
        %v504 = vpack.c.b16 %v496, %v495
        %513 = vmatprep.subr.bf16.mxu0 0
        %514 = vmatpush1.bf16.msra.mxu0 %v504
        %515 = vmatprep.subr.bf16.mxu0 0
        %516 = vmatpush1.bf16.msra.mxu0 %v503
        %517 = vmatprep.subr.bf16.mxu0 0
        %518 = vmatpush1.bf16.msra.mxu0 %v502
        %519 = vmatprep.subr.bf16.mxu0 0
        %520 = vmatpush1.bf16.msra.mxu0 %v501
        %521 = vmatprep.subr.bf16.mxu0 0
        %522 = vmatpush1.bf16.msra.mxu0 %v500
        %523 = vmatprep.subr.bf16.mxu0 0
        %524 = vmatpush1.bf16.msra.mxu0 %v499
        %525 = vmatprep.subr.bf16.mxu0 0
        %526 = vmatpush1.bf16.msra.mxu0 %v498
        %527 = vmatprep.subr.bf16.mxu0 0
        %528 = vmatpush1.bf16.msra.mxu0 %v497
        %529 = vmatprep.subr.bf16.mxu0 0
        %530 = vmatpush2.bf16.msra.mxu0 0
        %531 = vmatprep.subr.bf16.mxu0 0
        %532 = vmatpush2.bf16.msra.mxu0 0
        %533 = vmatprep.subr.bf16.mxu0 0
        %534 = vmatpush2.bf16.msra.mxu0 0
        %535 = vmatprep.subr.bf16.mxu0 0
        %536 = vmatpush2.bf16.msra.mxu0 0
        %537 = vmatprep.subr.bf16.mxu0 0
        %538 = vmatpush2.bf16.msra.mxu0 0
        %539 = vmatprep.subr.bf16.mxu0 0
        %540 = vmatpush2.bf16.msra.mxu0 0
        %541 = vmatprep.subr.bf16.mxu0 0
        %542 = vmatpush2.bf16.msra.mxu0 0
        %543 = vmatprep.subr.bf16.mxu0 0
        %544 = vmatpush2.bf16.msra.mxu0 0
        %545 = vmatprep.mubr.bf16.mxu0 0
        %546 = vmatmul.mubr.bf16.gmra.mxu0 %v462
        %v547 = vpop.f32.mrf.mxu0
        %v548 = vadd.f32 %v438, %v547
        %v549 = vpop.f32.mrf.mxu0
        %v550 = vpop.f32.mrf.mxu0
        %v551 = vadd.f32 %v441, %v550
        %v552 = vpop.f32.mrf.mxu0
        %553 = vmatprep.mubr.bf16.mxu0 0
        %554 = vmatmul.mubr.bf16.gmra.mxu0 %v461
        %v555 = vpop.f32.mrf.mxu0
        %v556 = vadd.f32 %v446, %v555
        %v557 = vpop.f32.mrf.mxu0
        %v558 = vpop.f32.mrf.mxu0
        %v559 = vpop.f32.mrf.mxu0
        %560 = vdwg.mxu0
        %s561 = scalar_lea.vmem [#allocation4], 128
        %v562 = vld [vmem:[%s561] sm:$0xf]
        %v563 = vld [vmem:[%s561 + $0x4] sm:$0xf]
        %v564 = vld [vmem:[%s561 + $0x8] sm:$0xf]
        %v565 = vld [vmem:[%s561 + $0xc] sm:$0xf]
        %v566 = vld [vmem:[%s561 + $0x10] sm:$0xf]
        %v567 = vld [vmem:[%s561 + $0x14] sm:$0xf]
        %v568 = vld [vmem:[%s561 + $0x18] sm:$0xf]
        %v569 = vld [vmem:[%s561 + $0x1c] sm:$0xf]
        %v570 = vld [vmem:[%s561 + $0x20] sm:$0xf]
        %v571 = vld [vmem:[%s561 + $0x24] sm:$0xf]
        %v572 = vld [vmem:[%s561 + $0x28] sm:$0xf]
        %v573 = vld [vmem:[%s561 + $0x2c] sm:$0xf]
        %v574 = vld [vmem:[%s561 + $0x30] sm:$0xf]
        %v575 = vld [vmem:[%s561 + $0x34] sm:$0xf]
        %v576 = vld [vmem:[%s561 + $0x38] sm:$0xf]
        %v577 = vld [vmem:[%s561 + $0x3c] sm:$0xf]
        %v578 = vpack.c.b16 %v331, %v330
        %v579 = vpack.c.b16 %v332, %v332
        %v598 = vunpack.c.l.b16 %v562
        %v599 = vunpack.c.l.b16 %v563
        %v600 = vunpack.c.l.b16 %v564
        %v601 = vunpack.c.l.b16 %v565
        %v602 = vunpack.c.l.b16 %v566
        %v603 = vunpack.c.l.b16 %v567
        %v604 = vunpack.c.l.b16 %v568
        %v605 = vunpack.c.l.b16 %v569
        %v606 = vunpack.c.l.b16 %v570
        %v607 = vunpack.c.l.b16 %v571
        %v608 = vunpack.c.l.b16 %v572
        %v609 = vunpack.c.l.b16 %v573
        %v610 = vunpack.c.l.b16 %v574
        %v611 = vunpack.c.l.b16 %v575
        %v612 = vunpack.c.l.b16 %v576
        %v613 = vunpack.c.l.b16 %v577
        %v614 = vpack.c.b16 %v599, %v598
        %v615 = vpack.c.b16 %v601, %v600
        %v616 = vpack.c.b16 %v603, %v602
        %v617 = vpack.c.b16 %v605, %v604
        %v618 = vpack.c.b16 %v607, %v606
        %v619 = vpack.c.b16 %v609, %v608
        %v620 = vpack.c.b16 %v611, %v610
        %v621 = vpack.c.b16 %v613, %v612
        %630 = vmatprep.subr.bf16.mxu0 0
        %631 = vmatpush1.bf16.msra.mxu0 %v621
        %632 = vmatprep.subr.bf16.mxu0 0
        %633 = vmatpush1.bf16.msra.mxu0 %v620
        %634 = vmatprep.subr.bf16.mxu0 0
        %635 = vmatpush1.bf16.msra.mxu0 %v619
        %636 = vmatprep.subr.bf16.mxu0 0
        %637 = vmatpush1.bf16.msra.mxu0 %v618
        %638 = vmatprep.subr.bf16.mxu0 0
        %639 = vmatpush1.bf16.msra.mxu0 %v617
        %640 = vmatprep.subr.bf16.mxu0 0
        %641 = vmatpush1.bf16.msra.mxu0 %v616
        %642 = vmatprep.subr.bf16.mxu0 0
        %643 = vmatpush1.bf16.msra.mxu0 %v615
        %644 = vmatprep.subr.bf16.mxu0 0
        %645 = vmatpush1.bf16.msra.mxu0 %v614
        %646 = vmatprep.subr.bf16.mxu0 0
        %647 = vmatpush2.bf16.msra.mxu0 0
        %648 = vmatprep.subr.bf16.mxu0 0
        %649 = vmatpush2.bf16.msra.mxu0 0
        %650 = vmatprep.subr.bf16.mxu0 0
        %651 = vmatpush2.bf16.msra.mxu0 0
        %652 = vmatprep.subr.bf16.mxu0 0
        %653 = vmatpush2.bf16.msra.mxu0 0
        %654 = vmatprep.subr.bf16.mxu0 0
        %655 = vmatpush2.bf16.msra.mxu0 0
        %656 = vmatprep.subr.bf16.mxu0 0
        %657 = vmatpush2.bf16.msra.mxu0 0
        %658 = vmatprep.subr.bf16.mxu0 0
        %659 = vmatpush2.bf16.msra.mxu0 0
        %660 = vmatprep.subr.bf16.mxu0 0
        %661 = vmatpush2.bf16.msra.mxu0 0
        %662 = vmatprep.mubr.bf16.mxu0 0
        %663 = vmatmul.mubr.bf16.gmra.mxu0 %v578
        %v664 = vpop.f32.mrf.mxu0
        %v665 = vadd.f32 0.0, %v664
        %v666 = vpop.f32.mrf.mxu0
        %v667 = vpop.f32.mrf.mxu0
        %v668 = vadd.f32 0.0, %v667
        %v669 = vpop.f32.mrf.mxu0
        %670 = vmatprep.mubr.bf16.mxu0 0
        %671 = vmatmul.mubr.bf16.gmra.mxu0 %v579
        %v672 = vpop.f32.mrf.mxu0
        %v673 = vadd.f32 0.0, %v672
        %v674 = vpop.f32.mrf.mxu0
        %v675 = vpop.f32.mrf.mxu0
        %v676 = vpop.f32.mrf.mxu0
        %677 = vdwg.mxu0
        %v678 = vadd.f32 %v548, %v665
        %v679 = vadd.f32 %v551, %v668
        %v680 = vadd.f32 %v556, %v673
        %v681 = vld [vmem:[%s2] sm:$0x1]
        %v683 = vlaneseq
        %v684 = vshrl.u32 %v683, 7
        %v685 = vsub.s32 0, %v684
        %v686 = vrot.slane %v681, %v685
        %v688 = vadd.f32 %v678, %v686
        %v689 = vadd.f32 %v679, %v686
        %v690 = vadd.f32 %v680, %v686
        %v691 = vmax.f32 %v688, 0.0
        %v692 = vmax.f32 %v689, 0.0
        %v693 = vmax.f32 %v690, 0.0
        %v694 = vlaneseq
        %v695 = vshrl.u32 %v694, 7
        %v696 = vadd.s32 %v695, 8
        %v697 = vadd.s32 %v695, 16
        %v698 = vadd.s32 %v695, 4294967295
        %v699 = vadd.s32 %v696, 4294967295
        %v700 = vadd.s32 %v697, 4294967295
        %vm701 = vcmp.ge.s32.totalorder %v698, 0
        %vm702 = vcmp.ge.s32.totalorder %v699, 0
        %vm703 = vcmp.ge.s32.totalorder %v700, 0
        %vm704 = vcmp.lt.s32.totalorder %v698, 16
        %vm705 = vcmp.lt.s32.totalorder %v699, 16
        %vm706 = vcmp.lt.s32.totalorder %v700, 16
        %vm707 = vmand %vm701, %vm704
        %vm708 = vmand %vm702, %vm705
        %vm709 = vmand %vm703, %vm706
        %v710 = vsel %vm707, 1, 0
        %v711 = vsel %vm708, 1, 0
        %v712 = vsel %vm709, 1, 0
        %vm713 = vcmp.eq.s32.totalorder %v710, 1
        %vm714 = vcmp.eq.s32.totalorder %v711, 1
        %vm715 = vcmp.eq.s32.totalorder %v712, 1
        %v716 = vsel %vm713, %v691, 0.0
        %v717 = vsel %vm714, %v692, 0.0
        %v718 = vsel %vm715, %v693, 0.0
        %v719 = vpack.c.bf16 %v717, %v716
        %v720 = vpack.c.bf16 %v718, %v718
        %v723 = vunpack.c.l.b16 %v719
        %v724 = vunpack.c.h.b16 %v719
        %v725 = vunpack.c.l.b16 %v720
        %v726 = vpack.c.b16 %v723, %v723
        %v727 = vpack.c.b16 %v724, %v724
        %v728 = vpack.c.b16 %v725, %v725
        %732 = vst [vmem:[#allocation3] sm:$0xf] %v726
        %733 = vst [vmem:[#allocation3 + $0x4] sm:$0xf] %v727
        %734 = vst [vmem:[#allocation3 + $0x8] sm:$0x1] %v728
        %v735 = vld [vmem:[#allocation2 + $0x4] sm:$0xf]
        %v736 = vld [vmem:[#allocation2 + $0x8] sm:$0xf]
        %v737 = vunpack.c.l.bf16 %v735
        %v738 = vunpack.c.l.bf16 %v736
        %v739 = vld [vmem:[#allocation3] sm:$0xf]
        %v740 = vld [vmem:[#allocation3 + $0x4] sm:$0xf]
        %v741 = vld [vmem:[#allocation6] sm:$0xf]
        %v742 = vld [vmem:[#allocation6 + $0x4] sm:$0xf]
        %v743 = vld [vmem:[#allocation6 + $0x8] sm:$0xf]
        %v744 = vld [vmem:[#allocation6 + $0xc] sm:$0xf]
        %v745 = vld [vmem:[#allocation6 + $0x10] sm:$0xf]
        %v746 = vld [vmem:[#allocation6 + $0x14] sm:$0xf]
        %v747 = vld [vmem:[#allocation6 + $0x18] sm:$0xf]
        %v748 = vld [vmem:[#allocation6 + $0x1c] sm:$0xf]
        %v749 = vld [vmem:[#allocation6 + $0x20] sm:$0xf]
        %v750 = vld [vmem:[#allocation6 + $0x24] sm:$0xf]
        %v751 = vld [vmem:[#allocation6 + $0x28] sm:$0xf]
        %v752 = vld [vmem:[#allocation6 + $0x2c] sm:$0xf]
        %v753 = vld [vmem:[#allocation6 + $0x30] sm:$0xf]
        %v754 = vld [vmem:[#allocation6 + $0x34] sm:$0xf]
        %v755 = vld [vmem:[#allocation6 + $0x38] sm:$0xf]
        %v756 = vld [vmem:[#allocation6 + $0x3c] sm:$0xf]
        %v757 = vld [vmem:[#allocation3 + $0x8] sm:$0x1]
        %s758 = scalar_lea.vmem [#allocation6], 64
        %v759 = vld [vmem:[%s758] sm:$0xf]
        %v760 = vld [vmem:[%s758 + $0x4] sm:$0xf]
        %v761 = vld [vmem:[%s758 + $0x8] sm:$0xf]
        %v762 = vld [vmem:[%s758 + $0xc] sm:$0xf]
        %v763 = vld [vmem:[%s758 + $0x10] sm:$0xf]
        %v764 = vld [vmem:[%s758 + $0x14] sm:$0xf]
        %v765 = vld [vmem:[%s758 + $0x18] sm:$0xf]
        %v766 = vld [vmem:[%s758 + $0x1c] sm:$0xf]
        %v767 = vld [vmem:[%s758 + $0x20] sm:$0xf]
        %v768 = vld [vmem:[%s758 + $0x24] sm:$0xf]
        %v769 = vld [vmem:[%s758 + $0x28] sm:$0xf]
        %v770 = vld [vmem:[%s758 + $0x2c] sm:$0xf]
        %v771 = vld [vmem:[%s758 + $0x30] sm:$0xf]
        %v772 = vld [vmem:[%s758 + $0x34] sm:$0xf]
        %v773 = vld [vmem:[%s758 + $0x38] sm:$0xf]
        %v774 = vld [vmem:[%s758 + $0x3c] sm:$0xf]
        %v778 = vunpack.c.l.b16 %v739
        %v779 = vunpack.c.l.b16 %v740
        %v780 = vunpack.c.l.b16 %v757
        %v781 = vpack.c.b16 %v779, %v778
        %v782 = vpack.c.b16 %v780, %v780
        %vm783 = vsmask.f32 7424
        %v785 = vshrl.u32 %v781, 16
        %v787 = vshll.u32 %v781, 16
        %v789 = vrot.slane %v787, 1
        %v790 = vor.u32 %v785, %v789
        %v792 = vshll.u32 %v782, 16
        %v794 = vrot.slane %v792, 1
        %v795 = vsel %vm783, %v790, %v794
        %v813 = vunpack.c.l.b16 %v759
        %v814 = vunpack.c.l.b16 %v760
        %v815 = vunpack.c.l.b16 %v761
        %v816 = vunpack.c.l.b16 %v762
        %v817 = vunpack.c.l.b16 %v763
        %v818 = vunpack.c.l.b16 %v764
        %v819 = vunpack.c.l.b16 %v765
        %v820 = vunpack.c.l.b16 %v766
        %v821 = vunpack.c.l.b16 %v767
        %v822 = vunpack.c.l.b16 %v768
        %v823 = vunpack.c.l.b16 %v769
        %v824 = vunpack.c.l.b16 %v770
        %v825 = vunpack.c.l.b16 %v771
        %v826 = vunpack.c.l.b16 %v772
        %v827 = vunpack.c.l.b16 %v773
        %v828 = vunpack.c.l.b16 %v774
        %v829 = vpack.c.b16 %v814, %v813
        %v830 = vpack.c.b16 %v816, %v815
        %v831 = vpack.c.b16 %v818, %v817
        %v832 = vpack.c.b16 %v820, %v819
        %v833 = vpack.c.b16 %v822, %v821
        %v834 = vpack.c.b16 %v824, %v823
        %v835 = vpack.c.b16 %v826, %v825
        %v836 = vpack.c.b16 %v828, %v827
        %845 = vmatprep.subr.bf16.mxu0 0
        %846 = vmatpush1.bf16.msra.mxu0 %v836
        %847 = vmatprep.subr.bf16.mxu0 0
        %848 = vmatpush1.bf16.msra.mxu0 %v835
        %849 = vmatprep.subr.bf16.mxu0 0
        %850 = vmatpush1.bf16.msra.mxu0 %v834
        %851 = vmatprep.subr.bf16.mxu0 0
        %852 = vmatpush1.bf16.msra.mxu0 %v833
        %853 = vmatprep.subr.bf16.mxu0 0
        %854 = vmatpush1.bf16.msra.mxu0 %v832
        %855 = vmatprep.subr.bf16.mxu0 0
        %856 = vmatpush1.bf16.msra.mxu0 %v831
        %857 = vmatprep.subr.bf16.mxu0 0
        %858 = vmatpush1.bf16.msra.mxu0 %v830
        %859 = vmatprep.subr.bf16.mxu0 0
        %860 = vmatpush1.bf16.msra.mxu0 %v829
        %861 = vmatprep.subr.bf16.mxu0 0
        %862 = vmatpush2.bf16.msra.mxu0 0
        %863 = vmatprep.subr.bf16.mxu0 0
        %864 = vmatpush2.bf16.msra.mxu0 0
        %865 = vmatprep.subr.bf16.mxu0 0
        %866 = vmatpush2.bf16.msra.mxu0 0
        %867 = vmatprep.subr.bf16.mxu0 0
        %868 = vmatpush2.bf16.msra.mxu0 0
        %869 = vmatprep.subr.bf16.mxu0 0
        %870 = vmatpush2.bf16.msra.mxu0 0
        %871 = vmatprep.subr.bf16.mxu0 0
        %872 = vmatpush2.bf16.msra.mxu0 0
        %873 = vmatprep.subr.bf16.mxu0 0
        %874 = vmatpush2.bf16.msra.mxu0 0
        %875 = vmatprep.subr.bf16.mxu0 0
        %876 = vmatpush2.bf16.msra.mxu0 0
        %877 = vmatprep.mubr.bf16.mxu0 0
        %878 = vmatmul.mubr.bf16.gmra.mxu0 %v795
        %v879 = vpop.f32.mrf.mxu0
        %v880 = vadd.f32 0.0, %v879
        %v881 = vpop.f32.mrf.mxu0
        %v882 = vpop.f32.mrf.mxu0
        %v883 = vadd.f32 0.0, %v882
        %v884 = vpop.f32.mrf.mxu0
        %885 = vdwg.mxu0
        %v903 = vunpack.c.l.b16 %v741
        %v904 = vunpack.c.l.b16 %v742
        %v905 = vunpack.c.l.b16 %v743
        %v906 = vunpack.c.l.b16 %v744
        %v907 = vunpack.c.l.b16 %v745
        %v908 = vunpack.c.l.b16 %v746
        %v909 = vunpack.c.l.b16 %v747
        %v910 = vunpack.c.l.b16 %v748
        %v911 = vunpack.c.l.b16 %v749
        %v912 = vunpack.c.l.b16 %v750
        %v913 = vunpack.c.l.b16 %v751
        %v914 = vunpack.c.l.b16 %v752
        %v915 = vunpack.c.l.b16 %v753
        %v916 = vunpack.c.l.b16 %v754
        %v917 = vunpack.c.l.b16 %v755
        %v918 = vunpack.c.l.b16 %v756
        %v919 = vpack.c.b16 %v904, %v903
        %v920 = vpack.c.b16 %v906, %v905
        %v921 = vpack.c.b16 %v908, %v907
        %v922 = vpack.c.b16 %v910, %v909
        %v923 = vpack.c.b16 %v912, %v911
        %v924 = vpack.c.b16 %v914, %v913
        %v925 = vpack.c.b16 %v916, %v915
        %v926 = vpack.c.b16 %v918, %v917
        %935 = vmatprep.subr.bf16.mxu0 0
        %936 = vmatpush1.bf16.msra.mxu0 %v926
        %937 = vmatprep.subr.bf16.mxu0 0
        %938 = vmatpush1.bf16.msra.mxu0 %v925
        %939 = vmatprep.subr.bf16.mxu0 0
        %940 = vmatpush1.bf16.msra.mxu0 %v924
        %941 = vmatprep.subr.bf16.mxu0 0
        %942 = vmatpush1.bf16.msra.mxu0 %v923
        %943 = vmatprep.subr.bf16.mxu0 0
        %944 = vmatpush1.bf16.msra.mxu0 %v922
        %945 = vmatprep.subr.bf16.mxu0 0
        %946 = vmatpush1.bf16.msra.mxu0 %v921
        %947 = vmatprep.subr.bf16.mxu0 0
        %948 = vmatpush1.bf16.msra.mxu0 %v920
        %949 = vmatprep.subr.bf16.mxu0 0
        %950 = vmatpush1.bf16.msra.mxu0 %v919
        %951 = vmatprep.subr.bf16.mxu0 0
        %952 = vmatpush2.bf16.msra.mxu0 0
        %953 = vmatprep.subr.bf16.mxu0 0
        %954 = vmatpush2.bf16.msra.mxu0 0
        %955 = vmatprep.subr.bf16.mxu0 0
        %956 = vmatpush2.bf16.msra.mxu0 0
        %957 = vmatprep.subr.bf16.mxu0 0
        %958 = vmatpush2.bf16.msra.mxu0 0
        %959 = vmatprep.subr.bf16.mxu0 0
        %960 = vmatpush2.bf16.msra.mxu0 0
        %961 = vmatprep.subr.bf16.mxu0 0
        %962 = vmatpush2.bf16.msra.mxu0 0
        %963 = vmatprep.subr.bf16.mxu0 0
        %964 = vmatpush2.bf16.msra.mxu0 0
        %965 = vmatprep.subr.bf16.mxu0 0
        %966 = vmatpush2.bf16.msra.mxu0 0
        %967 = vmatprep.mubr.bf16.mxu0 0
        %968 = vmatmul.mubr.bf16.gmra.mxu0 %v781
        %v969 = vpop.f32.mrf.mxu0
        %v970 = vadd.f32 %v880, %v969
        %v971 = vpop.f32.mrf.mxu0
        %v972 = vpop.f32.mrf.mxu0
        %v973 = vadd.f32 %v883, %v972
        %v974 = vpop.f32.mrf.mxu0
        %975 = vdwg.mxu0
        %v976 = vld [vmem:[#allocation3] sm:$0xe]
        %s977 = scalar_lea.vmem [#allocation6], 128
        %v978 = vld [vmem:[%s977] sm:$0xf]
        %v979 = vld [vmem:[%s977 + $0x4] sm:$0xf]
        %v980 = vld [vmem:[%s977 + $0x8] sm:$0xf]
        %v981 = vld [vmem:[%s977 + $0xc] sm:$0xf]
        %v982 = vld [vmem:[%s977 + $0x10] sm:$0xf]
        %v983 = vld [vmem:[%s977 + $0x14] sm:$0xf]
        %v984 = vld [vmem:[%s977 + $0x18] sm:$0xf]
        %v985 = vld [vmem:[%s977 + $0x1c] sm:$0xf]
        %v986 = vld [vmem:[%s977 + $0x20] sm:$0xf]
        %v987 = vld [vmem:[%s977 + $0x24] sm:$0xf]
        %v988 = vld [vmem:[%s977 + $0x28] sm:$0xf]
        %v989 = vld [vmem:[%s977 + $0x2c] sm:$0xf]
        %v990 = vld [vmem:[%s977 + $0x30] sm:$0xf]
        %v991 = vld [vmem:[%s977 + $0x34] sm:$0xf]
        %v992 = vld [vmem:[%s977 + $0x38] sm:$0xf]
        %v993 = vld [vmem:[%s977 + $0x3c] sm:$0xf]
        %v995 = vunpack.c.l.b16 %v976
        %v996 = vpack.c.b16 %v779, %v995
        %vm997 = vcmask 1046528
        %v998 = vrot.slane %v996, 1
        %v999 = vrot.slane %v782, 1
        %v1000 = vsel %vm997, %v998, %v999
        %v1018 = vunpack.c.l.b16 %v978
        %v1019 = vunpack.c.l.b16 %v979
        %v1020 = vunpack.c.l.b16 %v980
        %v1021 = vunpack.c.l.b16 %v981
        %v1022 = vunpack.c.l.b16 %v982
        %v1023 = vunpack.c.l.b16 %v983
        %v1024 = vunpack.c.l.b16 %v984
        %v1025 = vunpack.c.l.b16 %v985
        %v1026 = vunpack.c.l.b16 %v986
        %v1027 = vunpack.c.l.b16 %v987
        %v1028 = vunpack.c.l.b16 %v988
        %v1029 = vunpack.c.l.b16 %v989
        %v1030 = vunpack.c.l.b16 %v990
        %v1031 = vunpack.c.l.b16 %v991
        %v1032 = vunpack.c.l.b16 %v992
        %v1033 = vunpack.c.l.b16 %v993
        %v1034 = vpack.c.b16 %v1019, %v1018
        %v1035 = vpack.c.b16 %v1021, %v1020
        %v1036 = vpack.c.b16 %v1023, %v1022
        %v1037 = vpack.c.b16 %v1025, %v1024
        %v1038 = vpack.c.b16 %v1027, %v1026
        %v1039 = vpack.c.b16 %v1029, %v1028
        %v1040 = vpack.c.b16 %v1031, %v1030
        %v1041 = vpack.c.b16 %v1033, %v1032
        %1050 = vmatprep.subr.bf16.mxu0 0
        %1051 = vmatpush1.bf16.msra.mxu0 %v1041
        %1052 = vmatprep.subr.bf16.mxu0 0
        %1053 = vmatpush1.bf16.msra.mxu0 %v1040
        %1054 = vmatprep.subr.bf16.mxu0 0
        %1055 = vmatpush1.bf16.msra.mxu0 %v1039
        %1056 = vmatprep.subr.bf16.mxu0 0
        %1057 = vmatpush1.bf16.msra.mxu0 %v1038
        %1058 = vmatprep.subr.bf16.mxu0 0
        %1059 = vmatpush1.bf16.msra.mxu0 %v1037
        %1060 = vmatprep.subr.bf16.mxu0 0
        %1061 = vmatpush1.bf16.msra.mxu0 %v1036
        %1062 = vmatprep.subr.bf16.mxu0 0
        %1063 = vmatpush1.bf16.msra.mxu0 %v1035
        %1064 = vmatprep.subr.bf16.mxu0 0
        %1065 = vmatpush1.bf16.msra.mxu0 %v1034
        %1066 = vmatprep.subr.bf16.mxu0 0
        %1067 = vmatpush2.bf16.msra.mxu0 0
        %1068 = vmatprep.subr.bf16.mxu0 0
        %1069 = vmatpush2.bf16.msra.mxu0 0
        %1070 = vmatprep.subr.bf16.mxu0 0
        %1071 = vmatpush2.bf16.msra.mxu0 0
        %1072 = vmatprep.subr.bf16.mxu0 0
        %1073 = vmatpush2.bf16.msra.mxu0 0
        %1074 = vmatprep.subr.bf16.mxu0 0
        %1075 = vmatpush2.bf16.msra.mxu0 0
        %1076 = vmatprep.subr.bf16.mxu0 0
        %1077 = vmatpush2.bf16.msra.mxu0 0
        %1078 = vmatprep.subr.bf16.mxu0 0
        %1079 = vmatpush2.bf16.msra.mxu0 0
        %1080 = vmatprep.subr.bf16.mxu0 0
        %1081 = vmatpush2.bf16.msra.mxu0 0
        %1082 = vmatprep.mubr.bf16.mxu0 0
        %1083 = vmatmul.mubr.bf16.gmra.mxu0 %v1000
        %v1084 = vpop.f32.mrf.mxu0
        %v1085 = vadd.f32 0.0, %v1084
        %v1086 = vpop.f32.mrf.mxu0
        %v1087 = vpop.f32.mrf.mxu0
        %v1088 = vadd.f32 0.0, %v1087
        %v1089 = vpop.f32.mrf.mxu0
        %1090 = vdwg.mxu0
        %v1091 = vadd.f32 %v970, %v1085
        %v1092 = vadd.f32 %v973, %v1088
        %v1093 = vld [vmem:[%s4] sm:$0x1]
        %v1095 = vlaneseq
        %v1096 = vshrl.u32 %v1095, 7
        %v1097 = vsub.s32 0, %v1096
        %v1098 = vrot.slane %v1093, %v1097
        %v1100 = vadd.f32 %v1091, %v1098
        %v1101 = vadd.f32 %v1092, %v1098
        %v1102 = vadd.f32 %v1100, %v737
        %v1103 = vadd.f32 %v1101, %v738
        %v1104 = vmax.f32 %v1102, 0.0
        %v1105 = vmax.f32 %v1103, 0.0
        %v1106 = vpack.c.bf16 %v1105, %v1104
        %v1108 = vunpack.c.l.b16 %v1106
        %v1109 = vunpack.c.h.b16 %v1106
        %v1110 = vpack.c.b16 %v1108, %v1108
        %v1111 = vpack.c.b16 %v1109, %v1109
        %1114 = vst [vmem:[%s276] sm:$0xf] %v1110
        %1115 = vst [vmem:[%s276 + $0x4] sm:$0xf] %v1111
        %s1116 = smul.u32 2, %s23
        %p1117 = scmp.lt.s32.totalorder %s22, 1
        %s1118 = scalar_select %p1117, %s22, 1
        %p1119 = scmp.lt.s32.totalorder %s1116, 1
        %s1120 = scalar_select %p1119, %s1116, 1
        %s1121 = smul.addr %s1118, 2
        %s1122 = sadd.s32 %s1120, %s1121
        %s1123 = smul.addr %s1122, 4
        %s1124 = scalar_lea.vmem %s5, %s1123
        // Predicated region
        $region49: #{_lambda_.2} parent=39 // pred_check
          %p1125 = pneg %p160
        $region50: #{_lambda_.2} parent=39 // pred_check_branch
          %1127 = sbr.rel (%p1125) target = $region52
        $region51: #{_lambda_.2} parent=39 // pred_region
          %s1128 = smul.u32 2, %s23
        $region52: #{_lambda_.2} parent=39 // pred_fallthru
          _
      $region40: #{_lambda_.2} parent=5 // pred_fallthru
        _
      %p1129 = scmp.le.s32.totalorder 2, %s13
      // Predicated region
      $region53: #{_lambda_.2} parent=5 // pred_check
        %p1130 = pneg %p1129
      $region54: #{_lambda_.2} parent=5 // pred_check_branch
        %1132 = sbr.rel (%p1130) target = $region56
      $region55: #{_lambda_.2} parent=5 // pred_region
        %s1133 = ssub.s32 %s13, 2
        // Predicated region
        $region57: #{_lambda_.2} parent=55 // pred_check
          %p1134 = pneg %p166
        $region58: #{_lambda_.2} parent=55 // pred_check_branch
          %1136 = sbr.rel (%p1134) target = $region60
        $region59: #{_lambda_.2} parent=55 // pred_region
          %s1137 = smul.u32 2, %s25
          %p1138 = scmp.lt.s32.totalorder %s24, 1
          %s1139 = scalar_select %p1138, %s24, 1
          %p1140 = scmp.lt.s32.totalorder %s1137, 1
          %s1141 = scalar_select %p1140, %s1137, 1
          %s1142 = smul.addr %s1139, 2
          %s1143 = sadd.s32 %s1141, %s1142
          %s1144 = smul.addr %s1143, 4
          %s1145 = scalar_lea.vmem %s5, %s1144
        $region60: #{_lambda_.2} parent=55 // pred_fallthru
          _
      $region56: #{_lambda_.2} parent=5 // pred_fallthru
        _
    $region6: #{_lambda_.2} parent=1 // loop_footer
      %s17 = sadd.s32 1, %s13
    $region7: #{_lambda_.2} parent=1 // loop_footer_branch
      %12 = sbr.rel target = $region3
    $region8: #{_lambda_.2} parent=1 // loop_exit
      _
    %1146 = vsyncpa [#allocation5], 1
    %s1147 = scalar_lea.sflag [#allocation5], 1
    %1148 = vsyncpa %s1147, 1
    %1149 = vsyncpa [#allocation7], 1

</llo_original>
